<compile_context>
chip_gen: v7x
topology: tpu7x:2x2x1
jax: 0.10.0
libtpu: 0.0.40
codegen_flags: <defaults>
</compile_context>

<pallas_src>
import functools

import jax
import jax.numpy as jnp
from jax import lax
from jax.experimental import pallas as pl
from jax.experimental.pallas import tpu as pltpu


def _round_up(v, m):
    return ((v + m - 1) // m) * m


def normalized_linear_kernel(x_ref, w_ref, o_ref, acc_ref, xssq_ref, wssq_ref,
                             *, precision):
    """One (j, i, k) grid step of  out = normalize(x) @ normalize(W).T.

    x_ref:    [TM, TK] tile of x        (MXU dtype)
    w_ref:    [TN, TK] tile of W        (MXU dtype)
    o_ref:    [TM, TN] output tile      (original dtype)
    acc_ref:  [TM, TN] f32 accumulator  (resident across the K axis)
    xssq_ref: [TM, 1]  f32 running sum-of-squares of x rows
    wssq_ref: [1, TN]  f32 sum-of-squares of W rows, cached across i
    """
    i = pl.program_id(1)   # batch-block index (middle, "arbitrary")
    k = pl.program_id(2)   # reduction-block index (innermost, "arbitrary")

    @pl.when(k == 0)
    def _init():
        acc_ref[...] = jnp.zeros_like(acc_ref)
        xssq_ref[...] = jnp.zeros_like(xssq_ref)

    # W ssq is cached across batch blocks; only (re)initialize on the first.
    @pl.when((i == 0) & (k == 0))
    def _init_w():
        wssq_ref[...] = jnp.zeros_like(wssq_ref)

    x = x_ref[...]
    w = w_ref[...]

    # Unnormalized partial product: contract the last dim of both operands
    # (MXU consumes the "RHS transposed" form natively; no materialized W.T).
    acc_ref[...] += lax.dot_general(
        x, w,
        (((1,), (1,)), ((), ())),
        preferred_element_type=jnp.float32,
        precision=precision,
    )

    # Row sum-of-squares of x, accumulated alongside (f32).
    xf = x.astype(jnp.float32)
    xssq_ref[...] += jnp.sum(xf * xf, axis=-1, keepdims=True)

    # Row sum-of-squares of W, only on the first batch block.  Produced
    # directly in (1, TN) lane layout via a ones-row matmul.
    @pl.when(i == 0)
    def _acc_wssq():
        ones_row = jnp.ones((1, w.shape[-1]), dtype=w.dtype)
        wssq_ref[...] += lax.dot_general(
            ones_row, w * w,
            (((1,), (1,)), ((), ())),
            preferred_element_type=jnp.float32,
            precision=precision,
        )

    @pl.when(k == pl.num_programs(2) - 1)
    def _finalize():
        # F.normalize divides by max(||v||, 1e-12); equivalently scale the
        # unnormalized product by rsqrt(max(ssq, eps^2)) per row / column.
        eps2 = jnp.float32(1e-24)  # (1e-12)^2
        inv_x = lax.rsqrt(jnp.maximum(xssq_ref[...], eps2))   # [TM, 1]
        inv_w = lax.rsqrt(jnp.maximum(wssq_ref[...], eps2))   # [1, TN]
        o_ref[...] = (acc_ref[...] * inv_x * inv_w).astype(o_ref.dtype)


def _vmem_budget_bytes():
    try:
        cap = int(pltpu.get_tpu_info().vmem_capacity_bytes)
    except Exception:
        cap = 64 * 1024 * 1024  # conservative: v7x per-TC VMEM
    # Leave headroom for compiler-internal scratch: ~54 MiB on v7x,
    # ~109 MiB on v5e/v6e (128 MiB chips).
    return (cap * 85) // 100


def normalized_linear(x, w, *, tm=None, tn=None, tk=None,
                      mxu_dtype=jnp.bfloat16, precision=None):
    """out[b, o] = <x[b]/||x[b]||, w[o]/||w[o]||>.

    x: [B, in_features], w: [out_features, in_features] -> [B, out_features].
    """
    B, Din = x.shape
    Dout, Din_w = w.shape
    assert Din == Din_w, (Din, Din_w)

    out_dtype = x.dtype

    # Cast MXU operands in the wrapper (halves HBM traffic).  With f32
    # operands (mxu_dtype=None) request the exact multi-pass MXU path.
    if mxu_dtype is not None:
        x = x.astype(mxu_dtype)
        w = w.astype(mxu_dtype)
    elif precision is None:
        precision = lax.Precision.HIGHEST

    in_item = jnp.dtype(x.dtype).itemsize
    out_item = jnp.dtype(out_dtype).itemsize
    sub = {4: 8, 2: 16, 1: 32}.get(in_item, 8)      # dtype-aware sublane mult
    budget = _vmem_budget_bytes()

    # ---- tile selection --------------------------------------------------
    # Batch tile: whole (padded) batch resident when reasonable, so W is
    # streamed from HBM ~once (the dominant lever for ArcFace-like shapes).
    if tm is None:
        tm = min(_round_up(B, sub), 1024)
    tm = max(sub, _round_up(min(tm, _round_up(B, sub)), sub))

    if tn is None:
        tn = 512
    tn = max(128, _round_up(min(tn, _round_up(Dout, 128)), 128))
    # Prefer a tn that divides Dout exactly -> no padded copy of W along Dout.
    for cand in range(tn, 0, -128):
        if Dout % cand == 0:
            tn = cand
            break

    if tk is None:
        tk = Din            # single K step -> no K padding of x or W at all
    if tk < Din:
        tk = max(128, _round_up(min(tk, _round_up(Din, 128)), 128))

    def _need(tm_, tn_, tk_):
        return (2 * tm_ * tk_ * in_item          # x tile, double-buffered
                + 2 * tn_ * tk_ * in_item        # W tile, double-buffered
                + 2 * tm_ * tn_ * out_item       # output tile, double-buffered
                + tm_ * tn_ * 4                  # f32 accumulator
                + tm_ * 4 + max(tn_, 128) * 4)   # ssq scratches

    # Shrink tiles until the working set fits the per-generation VMEM budget.
    while _need(tm, tn, tk) > budget:
        if tk > 1024:
            tk = max(1024, _round_up(tk // 2, 128))
        elif tn > 128:
            tn = max(128, _round_up(tn // 2, 128))
        elif tm > 4 * sub:
            tm = max(sub, _round_up(tm // 2, sub))
        elif tk > 128:
            tk = max(128, _round_up(tk // 2, 128))
        else:
            break

    # ---- padding (x always cheap; W only when unavoidable) ----------------
    Bp = _round_up(B, tm)
    Kp = Din if tk == Din else _round_up(Din, tk)
    Np = _round_up(Dout, tn)
    if (Bp, Kp) != (B, Din):
        x = jnp.pad(x, ((0, Bp - B), (0, Kp - Din)))
    if (Np, Kp) != (Dout, Din):
        # Zero padding is exact for both the dot products and the ssq.
        w = jnp.pad(w, ((0, Np - Dout), (0, Kp - Din)))

    gj, gi, gk = Np // tn, Bp // tm, Kp // tk
    grid = (gj, gi, gk)

    vmem_limit = int(min(max(2 * _need(tm, tn, tk), 32 * 1024 * 1024), budget))

    kernel = functools.partial(normalized_linear_kernel, precision=precision)

    out = pl.pallas_call(
        kernel,
        out_shape=jax.ShapeDtypeStruct((Bp, Np), out_dtype),
        grid_spec=pltpu.PrefetchScalarGridSpec(
            num_scalar_prefetch=0,
            grid=grid,
            in_specs=[
                pl.BlockSpec((tm, tk), lambda j, i, k: (i, k)),   # x
                pl.BlockSpec((tn, tk), lambda j, i, k: (j, k)),   # W
            ],
            out_specs=pl.BlockSpec((tm, tn), lambda j, i, k: (i, j)),
            scratch_shapes=[
                pltpu.VMEM((tm, tn), jnp.float32),   # accumulator
                pltpu.VMEM((tm, 1), jnp.float32),    # x row ssq
                pltpu.VMEM((1, tn), jnp.float32),    # W row ssq (cached over i)
            ],
        ),
        compiler_params=pltpu.CompilerParams(
            # j (Dout) is the parallel axis: megacore splits disjoint W column
            # blocks (no duplicated W HBM reads).  i must stay "arbitrary" so
            # the i==0-gated W-ssq caching sees i=0 on every core.
            dimension_semantics=("parallel", "arbitrary", "arbitrary"),
            vmem_limit_bytes=vmem_limit,
        ),
        cost_estimate=pl.CostEstimate(
            flops=int(2 * Bp * Np * Kp + 2 * Np * Kp),
            transcendentals=int(Bp * gj + Np * gi),
            # Include HBM re-read factors: x re-read per j block, W per i block.
            bytes_accessed=int(Bp * Kp * in_item * gj
                               + Np * Kp * in_item * gi
                               + Bp * Np * out_item),
        ),
    )(x, w)

    if (Bp, Np) != (B, Dout):
        out = out[:B, :Dout]
    return out


def xavier_uniform(key, out_features, in_features):
    # nn.init.xavier_uniform_: U(-a, a), a = sqrt(6 / (fan_in + fan_out))
    bound = (6.0 / (in_features + out_features)) ** 0.5
    return jax.random.uniform(
        key, (out_features, in_features), jnp.float32, -bound, bound
    )


if __name__ == "__main__":
    key = jax.random.PRNGKey(0)
    k_x, k_w = jax.random.split(key)

    # Small, deterministic example; Din=320 is deliberately not a multiple of
    # 128 and B=40 not a multiple of the bf16 sublane tile, so the padding and
    # full-extent-K paths are exercised.
    B, in_features, out_features = 40, 320, 384
    x = jax.random.normal(k_x, (B, in_features), jnp.float32)
    W = xavier_uniform(k_w, out_features, in_features)

    # Pure-JAX reference (f32).
    xn = x / jnp.maximum(jnp.linalg.norm(x, axis=-1, keepdims=True), 1e-12)
    wn = W / jnp.maximum(jnp.linalg.norm(W, axis=-1, keepdims=True), 1e-12)
    ref = xn @ wn.T

    # 1) Default config: auto tiles (whole batch resident, single K step),
    #    bf16 MXU operands with f32 accumulation / normalization.
    out = normalized_linear(x, W)
    jax.block_until_ready(out)
    assert out.shape == (B, out_features)
    err = float(jnp.max(jnp.abs(out.astype(jnp.float32) - ref)))
    # Cosine similarities are bounded by 1; tolerance covers bf16 operands.
    assert jnp.allclose(out.astype(jnp.float32), ref, atol=2e-2, rtol=2e-2), err

    # 2) Forced small tiles -> multi-step grid (j, i, k) = (3, 3, 3): exercises
    #    K accumulation, the cached W-ssq gating across i, and padding of both
    #    operands.
    out_small = normalized_linear(x, W, tm=16, tn=128, tk=128)
    jax.block_until_ready(out_small)
    err_small = float(jnp.max(jnp.abs(out_small.astype(jnp.float32) - ref)))
    assert jnp.allclose(out_small.astype(jnp.float32), ref,
                        atol=2e-2, rtol=2e-2), err_small

    print("KERNEL_OK")
</pallas_src>

<mosaic_0001>
module attributes {stable_mosaic.version = 11 : i64} {
  func.func @normalized_linear_kernel(%arg0: i32, %arg1: i32, %arg2: i32, %arg3: memref<48x320xbf16, #tpu.memory_space<vmem>>, %arg4: memref<384x320xbf16, #tpu.memory_space<vmem>>, %arg5: memref<48x384xf32, #tpu.memory_space<vmem>>, %arg6: memref<48x384xf32, #tpu.memory_space<vmem>>, %arg7: memref<48x1xf32, #tpu.memory_space<vmem>>, %arg8: memref<1x384xf32, #tpu.memory_space<vmem>>) attributes {dimension_semantics = [#tpu.dimension_semantics<parallel>, #tpu.dimension_semantics<arbitrary>, #tpu.dimension_semantics<arbitrary>], iteration_bounds = array<i64: 1, 1, 1>, scalar_prefetch = 0 : i64, scratch_operands = 3 : i64, tpu.core_type = #tpu.core_type<tc>, window_params = [{transform_indices = @transform_0, window_bounds = array<i64: 48, 320>}, {transform_indices = @transform_1, window_bounds = array<i64: 384, 320>}, {transform_indices = @transform_2, window_bounds = array<i64: 48, 384>}]} {
    %c0_i32 = arith.constant 0 : i32
    %0 = arith.cmpi eq, %arg2, %c0_i32 : i32
    %1 = arith.extui %0 : i1 to i32
    %c0_i32_0 = arith.constant 0 : i32
    %2 = arith.cmpi ne, %1, %c0_i32_0 : i32
    scf.if %2 {
      %cst_20 = arith.constant 0.000000e+00 : f32
      %27 = vector.broadcast %cst_20 : f32 to vector<48x384xf32>
      %c0_21 = arith.constant 0 : index
      %c0_22 = arith.constant 0 : index
      %28 = vector.load %arg6[%c0_21, %c0_22] : memref<48x384xf32, #tpu.memory_space<vmem>>, vector<48x384xf32>
      tpu.vector_store %arg6[%c0_21, %c0_22], %27 {strides = array<i32>} : memref<48x384xf32, #tpu.memory_space<vmem>>, vector<48x384xf32>,
      %cst_23 = arith.constant 0.000000e+00 : f32
      %29 = vector.broadcast %cst_23 : f32 to vector<48x1xf32>
      %c0_24 = arith.constant 0 : index
      %c0_25 = arith.constant 0 : index
      %30 = vector.load %arg7[%c0_24, %c0_25] : memref<48x1xf32, #tpu.memory_space<vmem>>, vector<48x1xf32>
      tpu.vector_store %arg7[%c0_24, %c0_25], %29 {strides = array<i32>} : memref<48x1xf32, #tpu.memory_space<vmem>>, vector<48x1xf32>,
    } else {
    }
    %c0_i32_1 = arith.constant 0 : i32
    %3 = arith.cmpi eq, %arg1, %c0_i32_1 : i32
    %c0_i32_2 = arith.constant 0 : i32
    %4 = arith.cmpi eq, %arg2, %c0_i32_2 : i32
    %5 = arith.andi %3, %4 : i1
    %6 = arith.extui %5 : i1 to i32
    %c0_i32_3 = arith.constant 0 : i32
    %7 = arith.cmpi ne, %6, %c0_i32_3 : i32
    scf.if %7 {
      %cst_20 = arith.constant 0.000000e+00 : f32
      %27 = vector.broadcast %cst_20 : f32 to vector<1x384xf32>
      %c0_21 = arith.constant 0 : index
      %c0_22 = arith.constant 0 : index
      %28 = vector.load %arg8[%c0_21, %c0_22] : memref<1x384xf32, #tpu.memory_space<vmem>>, vector<1x384xf32>
      tpu.vector_store %arg8[%c0_21, %c0_22], %27 {strides = array<i32>} : memref<1x384xf32, #tpu.memory_space<vmem>>, vector<1x384xf32>,
    } else {
    }
    %c0 = arith.constant 0 : index
    %c0_4 = arith.constant 0 : index
    %8 = vector.load %arg3[%c0, %c0_4] : memref<48x320xbf16, #tpu.memory_space<vmem>>, vector<48x320xbf16>
    %c0_5 = arith.constant 0 : index
    %c0_6 = arith.constant 0 : index
    %9 = vector.load %arg4[%c0_5, %c0_6] : memref<384x320xbf16, #tpu.memory_space<vmem>>, vector<384x320xbf16>
    %c0_7 = arith.constant 0 : index
    %c0_8 = arith.constant 0 : index
    %10 = vector.load %arg6[%c0_7, %c0_8] : memref<48x384xf32, #tpu.memory_space<vmem>>, vector<48x384xf32>
    %cst = arith.constant dense<0.000000e+00> : vector<48x384xf32>
    %11 = tpu.matmul %8, %9, %cst {dimension_numbers = #tpu.dot_dimension_numbers<[1], [1], [0], [0], [0, 0, 1, 0], [], []>} : vector<48x320xbf16>, vector<384x320xbf16>, vector<48x384xf32> -> vector<48x384xf32>
    %12 = arith.addf %10, %11 : vector<48x384xf32>
    %c0_9 = arith.constant 0 : index
    %c0_10 = arith.constant 0 : index
    %13 = vector.load %arg6[%c0_9, %c0_10] : memref<48x384xf32, #tpu.memory_space<vmem>>, vector<48x384xf32>
    tpu.vector_store %arg6[%c0_9, %c0_10], %12 {strides = array<i32>} : memref<48x384xf32, #tpu.memory_space<vmem>>, vector<48x384xf32>,
    %14 = arith.extf %8 : vector<48x320xbf16> to vector<48x320xf32>
    %c0_11 = arith.constant 0 : index
    %c0_12 = arith.constant 0 : index
    %15 = vector.load %arg7[%c0_11, %c0_12] : memref<48x1xf32, #tpu.memory_space<vmem>>, vector<48x1xf32>
    %16 = arith.mulf %14, %14 : vector<48x320xf32>
    %cst_13 = arith.constant dense<0.000000e+00> : vector<48xf32>
    %17 = vector.multi_reduction <add>, %16, %cst_13 [1] : vector<48x320xf32> to vector<48xf32>
    %18 = vector.shape_cast %17 : vector<48xf32> to vector<48x1xf32>
    %19 = arith.addf %15, %18 : vector<48x1xf32>
    %c0_14 = arith.constant 0 : index
    %c0_15 = arith.constant 0 : index
    %20 = vector.load %arg7[%c0_14, %c0_15] : memref<48x1xf32, #tpu.memory_space<vmem>>, vector<48x1xf32>
    tpu.vector_store %arg7[%c0_14, %c0_15], %19 {strides = array<i32>} : memref<48x1xf32, #tpu.memory_space<vmem>>, vector<48x1xf32>,
    %c0_i32_16 = arith.constant 0 : i32
    %21 = arith.cmpi eq, %arg1, %c0_i32_16 : i32
    %22 = arith.extui %21 : i1 to i32
    %c0_i32_17 = arith.constant 0 : i32
    %23 = arith.cmpi ne, %22, %c0_i32_17 : i32
    scf.if %23 {
      %cst_20 = arith.constant 1.000000e+00 : bf16
      %27 = vector.broadcast %cst_20 : bf16 to vector<1x320xbf16>
      %c0_21 = arith.constant 0 : index
      %c0_22 = arith.constant 0 : index
      %28 = vector.load %arg8[%c0_21, %c0_22] : memref<1x384xf32, #tpu.memory_space<vmem>>, vector<1x384xf32>
      %29 = arith.mulf %9, %9 : vector<384x320xbf16>
      %cst_23 = arith.constant dense<0.000000e+00> : vector<1x384xf32>
      %30 = tpu.matmul %27, %29, %cst_23 {dimension_numbers = #tpu.dot_dimension_numbers<[1], [1], [0], [0], [0, 0, 1, 0], [], []>} : vector<1x320xbf16>, vector<384x320xbf16>, vector<1x384xf32> -> vector<1x384xf32>
      %31 = arith.addf %28, %30 : vector<1x384xf32>
      %c0_24 = arith.constant 0 : index
      %c0_25 = arith.constant 0 : index
      %32 = vector.load %arg8[%c0_24, %c0_25] : memref<1x384xf32, #tpu.memory_space<vmem>>, vector<1x384xf32>
      tpu.vector_store %arg8[%c0_24, %c0_25], %31 {strides = array<i32>} : memref<1x384xf32, #tpu.memory_space<vmem>>, vector<1x384xf32>,
    } else {
    }
    %c0_i32_18 = arith.constant 0 : i32
    %24 = arith.cmpi eq, %arg2, %c0_i32_18 : i32
    %25 = arith.extui %24 : i1 to i32
    %c0_i32_19 = arith.constant 0 : i32
    %26 = arith.cmpi ne, %25, %c0_i32_19 : i32
    scf.if %26 {
      %c0_20 = arith.constant 0 : index
      %c0_21 = arith.constant 0 : index
      %27 = vector.load %arg7[%c0_20, %c0_21] : memref<48x1xf32, #tpu.memory_space<vmem>>, vector<48x1xf32>
      %cst_22 = arith.constant 1.000000e-24 : f32
      %28 = vector.broadcast %cst_22 : f32 to vector<48x1xf32>
      %29 = arith.maximumf %27, %28 : vector<48x1xf32>
      %30 = math.rsqrt %29 : vector<48x1xf32>
      %c0_23 = arith.constant 0 : index
      %c0_24 = arith.constant 0 : index
      %31 = vector.load %arg8[%c0_23, %c0_24] : memref<1x384xf32, #tpu.memory_space<vmem>>, vector<1x384xf32>
      %cst_25 = arith.constant 1.000000e-24 : f32
      %32 = vector.broadcast %cst_25 : f32 to vector<1x384xf32>
      %33 = arith.maximumf %31, %32 : vector<1x384xf32>
      %34 = math.rsqrt %33 : vector<1x384xf32>
      %c0_26 = arith.constant 0 : index
      %c0_27 = arith.constant 0 : index
      %35 = vector.load %arg6[%c0_26, %c0_27] : memref<48x384xf32, #tpu.memory_space<vmem>>, vector<48x384xf32>
      %36 = vector.broadcast %30 : vector<48x1xf32> to vector<48x384xf32>
      %37 = arith.mulf %35, %36 : vector<48x384xf32>
      %38 = vector.broadcast %34 : vector<1x384xf32> to vector<48x384xf32>
      %39 = arith.mulf %37, %38 : vector<48x384xf32>
      %c0_28 = arith.constant 0 : index
      %c0_29 = arith.constant 0 : index
      %40 = vector.load %arg5[%c0_28, %c0_29] : memref<48x384xf32, #tpu.memory_space<vmem>>, vector<48x384xf32>
      tpu.vector_store %arg5[%c0_28, %c0_29], %39 {strides = array<i32>} : memref<48x384xf32, #tpu.memory_space<vmem>>, vector<48x384xf32>,
    } else {
    }
    return
  }
  func.func @transform_0(%arg0: i32, %arg1: i32, %arg2: i32) -> (i32, i32) {
    %c0_i32 = arith.constant 0 : i32
    return %arg1, %arg2 : i32, i32
  }
  func.func @transform_1(%arg0: i32, %arg1: i32, %arg2: i32) -> (i32, i32) {
    %c0_i32 = arith.constant 0 : i32
    return %arg0, %arg2 : i32, i32
  }
  func.func @transform_2(%arg0: i32, %arg1: i32, %arg2: i32) -> (i32, i32) {
    %c0_i32 = arith.constant 0 : i32
    return %arg1, %arg0 : i32, i32
  }
}

</mosaic_0001>

<llo_original>
// kernel: tpu_custom_call.1
$region0: #{tpu_custom_call.1}
  #allocation0 [shape = 'u32[]', space=smem, size = 0x4, offset = 0x4, fixed_abs, tag = 'smem constant byte address 0x4 - core index']
  #allocation1 [shape = 'u32[144,128]{1,0:T(1,128)}', space=vmem, size = 0x12000, scoped, tag = 'internal scratch']
  #allocation2 [shape = 'f32[48,384]{1,0:T(8,128)}', space=vmem, size = 0x12000, scoped, tag = 'scratch operand']
  #allocation3 [shape = 'f32[48,1]{1,0:T(8,128)}', space=vmem, size = 0x6000, scoped, tag = 'scratch operand']
  #allocation4 [shape = 'f32[1,384]{1,0:T(1,128)}', space=vmem, size = 0x600, scoped, tag = 'scratch operand']
  %s0 = inlined_call_operand.vmem [shape: bf16[48,320], index: 0, kind: input, shape index: {}]
  %s1 = inlined_call_operand.vmem [shape: bf16[384,320], index: 1, kind: input, shape index: {}]
  %s2 = inlined_call_operand.hbm [shape: f32[48,384], index: 2, kind: output, shape index: {}]
  %s3 = sld [smem:[#allocation0]]
  $region34: #{tpu_custom_call.1} parent=0
    _
  %s5 = ssub.s32 1, %s3
  %s6 = scalar_select 0, %s5, %s3
  $region1: #{tpu_custom_call.1} parent=0
    #allocation5 [shape = 'u8[73728]{0}', space=vmem, size = 0x12000, scoped, tag = 'output window, operand 0, single buffered']
    #allocation6 [shape = 's32[1]{0}', space=sflag, size = 0x4, scoped, tag = 'scoped memory for tpu_custom_call.1']
    %7 = vsyncpa [#allocation6], 0
    // Predicated region
    $region2: #{tpu_custom_call.1} parent=1 // pred_check
      _
    $region3: #{tpu_custom_call.1} parent=1 // pred_check_branch
      %9 = sbr.rel (0) target = $region5
    $region4: #{tpu_custom_call.1} parent=1 // pred_region
      _
    $region5: #{tpu_custom_call.1} parent=1 // pred_fallthru
      _
    // Predicated region
    $region6: #{tpu_custom_call.1} parent=1 // pred_check
      _
    $region7: #{tpu_custom_call.1} parent=1 // pred_check_branch
      %11 = sbr.rel (0) target = $region9
    $region8: #{tpu_custom_call.1} parent=1 // pred_region
      _
    $region9: #{tpu_custom_call.1} parent=1 // pred_fallthru
      _
    %p14 = scmp.eq.s32.totalorder 0, 0
    // Predicated region
    $region10: #{tpu_custom_call.1} parent=1 // pred_check
      %p15 = pneg %p14
    $region11: #{tpu_custom_call.1} parent=1 // pred_check_branch
      %17 = sbr.rel (%p15) target = $region13
    $region12: #{tpu_custom_call.1} parent=1 // pred_region
      %18 = vst [vmem:[#allocation2] sm:$0xff] 0.0
      %19 = vst [vmem:[#allocation2 + $0x8] sm:$0xff] 0.0
      %20 = vst [vmem:[#allocation2 + $0x10] sm:$0xff] 0.0
      %21 = vst [vmem:[#allocation2 + $0x18] sm:$0xff] 0.0
      %22 = vst [vmem:[#allocation2 + $0x20] sm:$0xff] 0.0
      %23 = vst [vmem:[#allocation2 + $0x28] sm:$0xff] 0.0
      %24 = vst [vmem:[#allocation2 + $0x30] sm:$0xff] 0.0
      %25 = vst [vmem:[#allocation2 + $0x38] sm:$0xff] 0.0
      %26 = vst [vmem:[#allocation2 + $0x40] sm:$0xff] 0.0
      %27 = vst [vmem:[#allocation2 + $0x48] sm:$0xff] 0.0
      %28 = vst [vmem:[#allocation2 + $0x50] sm:$0xff] 0.0
      %29 = vst [vmem:[#allocation2 + $0x58] sm:$0xff] 0.0
      %30 = vst [vmem:[#allocation2 + $0x60] sm:$0xff] 0.0
      %31 = vst [vmem:[#allocation2 + $0x68] sm:$0xff] 0.0
      %32 = vst [vmem:[#allocation2 + $0x70] sm:$0xff] 0.0
      %33 = vst [vmem:[#allocation2 + $0x78] sm:$0xff] 0.0
      %34 = vst [vmem:[#allocation2 + $0x80] sm:$0xff] 0.0
      %35 = vst [vmem:[#allocation2 + $0x88] sm:$0xff] 0.0
      %vm36 = vcmask 7168
      %37 = vst.msk [vmem:[#allocation3] sm:$0xff] %vm36, 0.0
      %38 = vst.msk [vmem:[#allocation3 + $0x8] sm:$0xff] %vm36, 0.0
      %39 = vst.msk [vmem:[#allocation3 + $0x10] sm:$0xff] %vm36, 0.0
      %40 = vst.msk [vmem:[#allocation3 + $0x18] sm:$0xff] %vm36, 0.0
      %41 = vst.msk [vmem:[#allocation3 + $0x20] sm:$0xff] %vm36, 0.0
      %42 = vst.msk [vmem:[#allocation3 + $0x28] sm:$0xff] %vm36, 0.0
    $region13: #{tpu_custom_call.1} parent=1 // pred_fallthru
      _
    %p43 = scmp.eq.s32.totalorder 0, 0
    %p44 = pnand %p43, %p14
    %p45 = pneg %p44
    // Predicated region
    $region14: #{tpu_custom_call.1} parent=1 // pred_check
      _
    $region15: #{tpu_custom_call.1} parent=1 // pred_check_branch
      %47 = sbr.rel (%p44) target = $region17
    $region16: #{tpu_custom_call.1} parent=1 // pred_region
      %v48 = vlaneseq
      %vm49 = vcmp.ge.s32.totalorder %v48, 0
      %vm50 = vcmp.lt.s32.totalorder %v48, 384
      %vm51 = vmand %vm49, %vm50
      %52 = vst.msk [vmem:[#allocation4] sm:$0x7] %vm51, 0.0
    $region17: #{tpu_custom_call.1} parent=1 // pred_fallthru
      _
    %v53 = vld [vmem:[%s0] sm:$0xff]
    %v54 = vld [vmem:[%s0 + $0x8] sm:$0xf]
    %v55 = vld [vmem:[%s0 + $0xc] sm:$0xff]
    %v56 = vld [vmem:[%s0 + $0x14] sm:$0xf]
    %v57 = vld [vmem:[%s0 + $0x18] sm:$0xff]
    %v58 = vld [vmem:[%s0 + $0x20] sm:$0xf]
    %v59 = vld [vmem:[%s0 + $0x24] sm:$0xff]
    %v60 = vld [vmem:[%s0 + $0x2c] sm:$0xf]
    %v61 = vld [vmem:[%s0 + $0x30] sm:$0xff]
    %v62 = vld [vmem:[%s0 + $0x38] sm:$0xf]
    %v63 = vld [vmem:[%s0 + $0x3c] sm:$0xff]
    %v64 = vld [vmem:[%s0 + $0x44] sm:$0xf]
    %v65 = vld [vmem:[%s1] sm:$0xff]
    %v66 = vld [vmem:[%s1 + $0x8] sm:$0xf]
    %v67 = vld [vmem:[%s1 + $0xc] sm:$0xff]
    %v68 = vld [vmem:[%s1 + $0x14] sm:$0xf]
    %v69 = vld [vmem:[%s1 + $0x18] sm:$0xff]
    %v70 = vld [vmem:[%s1 + $0x20] sm:$0xf]
    %v71 = vld [vmem:[%s1 + $0x24] sm:$0xff]
    %v72 = vld [vmem:[%s1 + $0x2c] sm:$0xf]
    %v73 = vld [vmem:[%s1 + $0x30] sm:$0xff]
    %v74 = vld [vmem:[%s1 + $0x38] sm:$0xf]
    %v75 = vld [vmem:[%s1 + $0x3c] sm:$0xff]
    %v76 = vld [vmem:[%s1 + $0x44] sm:$0xf]
    %v77 = vld [vmem:[%s1 + $0x48] sm:$0xff]
    %v78 = vld [vmem:[%s1 + $0x50] sm:$0xf]
    %v79 = vld [vmem:[%s1 + $0x54] sm:$0xff]
    %v80 = vld [vmem:[%s1 + $0x5c] sm:$0xf]
    %v81 = vld [vmem:[%s1 + $0x60] sm:$0xff]
    %v82 = vld [vmem:[%s1 + $0x68] sm:$0xf]
    %v83 = vld [vmem:[%s1 + $0x6c] sm:$0xff]
    %v84 = vld [vmem:[%s1 + $0x74] sm:$0xf]
    %v85 = vld [vmem:[%s1 + $0x78] sm:$0xff]
    %v86 = vld [vmem:[%s1 + $0x80] sm:$0xf]
    %v87 = vld [vmem:[%s1 + $0x84] sm:$0xff]
    %v88 = vld [vmem:[%s1 + $0x8c] sm:$0xf]
    %v89 = vld [vmem:[%s1 + $0x90] sm:$0xff]
    %v90 = vld [vmem:[%s1 + $0x98] sm:$0xf]
    %v91 = vld [vmem:[%s1 + $0x9c] sm:$0xff]
    %v92 = vld [vmem:[%s1 + $0xa4] sm:$0xf]
    %v93 = vld [vmem:[%s1 + $0xa8] sm:$0xff]
    %v94 = vld [vmem:[%s1 + $0xb0] sm:$0xf]
    %v95 = vld [vmem:[%s1 + $0xb4] sm:$0xff]
    %v96 = vld [vmem:[%s1 + $0xbc] sm:$0xf]
    %v97 = vld [vmem:[%s1 + $0xc0] sm:$0xff]
    %v98 = vld [vmem:[%s1 + $0xc8] sm:$0xf]
    %v99 = vld [vmem:[%s1 + $0xcc] sm:$0xff]
    %v100 = vld [vmem:[%s1 + $0xd4] sm:$0xf]
    %v101 = vld [vmem:[%s1 + $0xd8] sm:$0xff]
    %v102 = vld [vmem:[%s1 + $0xe0] sm:$0xf]
    %v103 = vld [vmem:[%s1 + $0xe4] sm:$0xff]
    %v104 = vld [vmem:[%s1 + $0xec] sm:$0xf]
    %v105 = vld [vmem:[%s1 + $0xf0] sm:$0xff]
    %v106 = vld [vmem:[%s1 + $0xf8] sm:$0xf]
    %v107 = vld [vmem:[%s1 + $0xfc] sm:$0xff]
    %v108 = vld [vmem:[%s1 + $0x104] sm:$0xf]
    %v109 = vld [vmem:[%s1 + $0x108] sm:$0xff]
    %v110 = vld [vmem:[%s1 + $0x110] sm:$0xf]
    %v111 = vld [vmem:[%s1 + $0x114] sm:$0xff]
    %v112 = vld [vmem:[%s1 + $0x11c] sm:$0xf]
    %v113 = vld [vmem:[%s1 + $0x120] sm:$0xff]
    %v114 = vld [vmem:[%s1 + $0x128] sm:$0xf]
    %v115 = vld [vmem:[%s1 + $0x12c] sm:$0xff]
    %v116 = vld [vmem:[%s1 + $0x134] sm:$0xf]
    %v117 = vld [vmem:[%s1 + $0x138] sm:$0xff]
    %v118 = vld [vmem:[%s1 + $0x140] sm:$0xf]
    %v119 = vld [vmem:[%s1 + $0x144] sm:$0xff]
    %v120 = vld [vmem:[%s1 + $0x14c] sm:$0xf]
    %v121 = vld [vmem:[%s1 + $0x150] sm:$0xff]
    %v122 = vld [vmem:[%s1 + $0x158] sm:$0xf]
    %v123 = vld [vmem:[%s1 + $0x15c] sm:$0xff]
    %v124 = vld [vmem:[%s1 + $0x164] sm:$0xf]
    %v125 = vld [vmem:[%s1 + $0x168] sm:$0xff]
    %v126 = vld [vmem:[%s1 + $0x170] sm:$0xf]
    %v127 = vld [vmem:[%s1 + $0x174] sm:$0xff]
    %v128 = vld [vmem:[%s1 + $0x17c] sm:$0xf]
    %v129 = vld [vmem:[%s1 + $0x180] sm:$0xff]
    %v130 = vld [vmem:[%s1 + $0x188] sm:$0xf]
    %v131 = vld [vmem:[%s1 + $0x18c] sm:$0xff]
    %v132 = vld [vmem:[%s1 + $0x194] sm:$0xf]
    %v133 = vld [vmem:[%s1 + $0x198] sm:$0xff]
    %v134 = vld [vmem:[%s1 + $0x1a0] sm:$0xf]
    %v135 = vld [vmem:[%s1 + $0x1a4] sm:$0xff]
    %v136 = vld [vmem:[%s1 + $0x1ac] sm:$0xf]
    %v137 = vld [vmem:[%s1 + $0x1b0] sm:$0xff]
    %v138 = vld [vmem:[%s1 + $0x1b8] sm:$0xf]
    %v139 = vld [vmem:[%s1 + $0x1bc] sm:$0xff]
    %v140 = vld [vmem:[%s1 + $0x1c4] sm:$0xf]
    %v141 = vld [vmem:[%s1 + $0x1c8] sm:$0xff]
    %v142 = vld [vmem:[%s1 + $0x1d0] sm:$0xf]
    %v143 = vld [vmem:[%s1 + $0x1d4] sm:$0xff]
    %v144 = vld [vmem:[%s1 + $0x1dc] sm:$0xf]
    %v145 = vld [vmem:[%s1 + $0x1e0] sm:$0xff]
    %v146 = vld [vmem:[%s1 + $0x1e8] sm:$0xf]
    %v147 = vld [vmem:[%s1 + $0x1ec] sm:$0xff]
    %v148 = vld [vmem:[%s1 + $0x1f4] sm:$0xf]
    %v149 = vld [vmem:[%s1 + $0x1f8] sm:$0xff]
    %v150 = vld [vmem:[%s1 + $0x200] sm:$0xf]
    %v151 = vld [vmem:[%s1 + $0x204] sm:$0xff]
    %v152 = vld [vmem:[%s1 + $0x20c] sm:$0xf]
    %v153 = vld [vmem:[%s1 + $0x210] sm:$0xff]
    %v154 = vld [vmem:[%s1 + $0x218] sm:$0xf]
    %v155 = vld [vmem:[%s1 + $0x21c] sm:$0xff]
    %v156 = vld [vmem:[%s1 + $0x224] sm:$0xf]
    %v157 = vld [vmem:[%s1 + $0x228] sm:$0xff]
    %v158 = vld [vmem:[%s1 + $0x230] sm:$0xf]
    %v159 = vld [vmem:[%s1 + $0x234] sm:$0xff]
    %v160 = vld [vmem:[%s1 + $0x23c] sm:$0xf]
    %v161 = vld [vmem:[#allocation2] sm:$0xff]
    %v162 = vld [vmem:[#allocation2 + $0x8] sm:$0xff]
    %v163 = vld [vmem:[#allocation2 + $0x10] sm:$0xff]
    %v164 = vld [vmem:[#allocation2 + $0x18] sm:$0xff]
    %v165 = vld [vmem:[#allocation2 + $0x20] sm:$0xff]
    %v166 = vld [vmem:[#allocation2 + $0x28] sm:$0xff]
    %v167 = vld [vmem:[#allocation2 + $0x30] sm:$0xff]
    %v168 = vld [vmem:[#allocation2 + $0x38] sm:$0xff]
    %v169 = vld [vmem:[#allocation2 + $0x40] sm:$0xff]
    %v170 = vld [vmem:[#allocation2 + $0x48] sm:$0xff]
    %v171 = vld [vmem:[#allocation2 + $0x50] sm:$0xff]
    %v172 = vld [vmem:[#allocation2 + $0x58] sm:$0xff]
    %v173 = vld [vmem:[#allocation2 + $0x60] sm:$0xff]
    %v174 = vld [vmem:[#allocation2 + $0x68] sm:$0xff]
    %v175 = vld [vmem:[#allocation2 + $0x70] sm:$0xff]
    %v176 = vld [vmem:[#allocation2 + $0x78] sm:$0xff]
    %v177 = vld [vmem:[#allocation2 + $0x80] sm:$0xff]
    %v178 = vld [vmem:[#allocation2 + $0x88] sm:$0xff]
    %v191 = vunpack.c.l.b16 %v53
    %v192 = vunpack.c.h.b16 %v53
    %v193 = vunpack.c.l.b16 %v54
    %v194 = vunpack.c.l.b16 %v55
    %v195 = vunpack.c.h.b16 %v55
    %v196 = vunpack.c.l.b16 %v56
    %v197 = vunpack.c.l.b16 %v57
    %v198 = vunpack.c.h.b16 %v57
    %v199 = vunpack.c.l.b16 %v58
    %v200 = vunpack.c.l.b16 %v59
    %v201 = vunpack.c.h.b16 %v59
    %v202 = vunpack.c.l.b16 %v60
    %v203 = vunpack.c.l.b16 %v61
    %v204 = vunpack.c.h.b16 %v61
    %v205 = vunpack.c.l.b16 %v62
    %v206 = vunpack.c.l.b16 %v63
    %v207 = vunpack.c.h.b16 %v63
    %v208 = vunpack.c.l.b16 %v64
    %v209 = vpack.c.b16 %v194, %v191
    %v210 = vpack.c.b16 %v195, %v192
    %v211 = vpack.c.b16 %v196, %v193
    %v212 = vpack.c.b16 %v200, %v197
    %v213 = vpack.c.b16 %v201, %v198
    %v214 = vpack.c.b16 %v202, %v199
    %v215 = vpack.c.b16 %v206, %v203
    %v216 = vpack.c.b16 %v207, %v204
    %v217 = vpack.c.b16 %v208, %v205
    %v320 = vunpack.c.l.b16 %v65
    %v321 = vunpack.c.h.b16 %v65
    %v322 = vunpack.c.l.b16 %v66
    %v323 = vunpack.c.l.b16 %v67
    %v324 = vunpack.c.h.b16 %v67
    %v325 = vunpack.c.l.b16 %v68
    %v326 = vunpack.c.l.b16 %v69
    %v327 = vunpack.c.h.b16 %v69
    %v328 = vunpack.c.l.b16 %v70
    %v329 = vunpack.c.l.b16 %v71
    %v330 = vunpack.c.h.b16 %v71
    %v331 = vunpack.c.l.b16 %v72
    %v332 = vunpack.c.l.b16 %v73
    %v333 = vunpack.c.h.b16 %v73
    %v334 = vunpack.c.l.b16 %v74
    %v335 = vunpack.c.l.b16 %v75
    %v336 = vunpack.c.h.b16 %v75
    %v337 = vunpack.c.l.b16 %v76
    %v338 = vunpack.c.l.b16 %v77
    %v339 = vunpack.c.h.b16 %v77
    %v340 = vunpack.c.l.b16 %v78
    %v341 = vunpack.c.l.b16 %v79
    %v342 = vunpack.c.h.b16 %v79
    %v343 = vunpack.c.l.b16 %v80
    %v344 = vunpack.c.l.b16 %v81
    %v345 = vunpack.c.h.b16 %v81
    %v346 = vunpack.c.l.b16 %v82
    %v347 = vunpack.c.l.b16 %v83
    %v348 = vunpack.c.h.b16 %v83
    %v349 = vunpack.c.l.b16 %v84
    %v350 = vunpack.c.l.b16 %v85
    %v351 = vunpack.c.h.b16 %v85
    %v352 = vunpack.c.l.b16 %v86
    %v353 = vunpack.c.l.b16 %v87
    %v354 = vunpack.c.h.b16 %v87
    %v355 = vunpack.c.l.b16 %v88
    %v356 = vunpack.c.l.b16 %v89
    %v357 = vunpack.c.h.b16 %v89
    %v358 = vunpack.c.l.b16 %v90
    %v359 = vunpack.c.l.b16 %v91
    %v360 = vunpack.c.h.b16 %v91
    %v361 = vunpack.c.l.b16 %v92
    %v362 = vunpack.c.l.b16 %v93
    %v363 = vunpack.c.h.b16 %v93
    %v364 = vunpack.c.l.b16 %v94
    %v365 = vunpack.c.l.b16 %v95
    %v366 = vunpack.c.h.b16 %v95
    %v367 = vunpack.c.l.b16 %v96
    %v368 = vunpack.c.l.b16 %v97
    %v369 = vunpack.c.h.b16 %v97
    %v370 = vunpack.c.l.b16 %v98
    %v371 = vunpack.c.l.b16 %v99
    %v372 = vunpack.c.h.b16 %v99
    %v373 = vunpack.c.l.b16 %v100
    %v374 = vunpack.c.l.b16 %v101
    %v375 = vunpack.c.h.b16 %v101
    %v376 = vunpack.c.l.b16 %v102
    %v377 = vunpack.c.l.b16 %v103
    %v378 = vunpack.c.h.b16 %v103
    %v379 = vunpack.c.l.b16 %v104
    %v380 = vunpack.c.l.b16 %v105
    %v381 = vunpack.c.h.b16 %v105
    %v382 = vunpack.c.l.b16 %v106
    %v383 = vunpack.c.l.b16 %v107
    %v384 = vunpack.c.h.b16 %v107
    %v385 = vunpack.c.l.b16 %v108
    %v386 = vunpack.c.l.b16 %v109
    %v387 = vunpack.c.h.b16 %v109
    %v388 = vunpack.c.l.b16 %v110
    %v389 = vunpack.c.l.b16 %v111
    %v390 = vunpack.c.h.b16 %v111
    %v391 = vunpack.c.l.b16 %v112
    %v392 = vunpack.c.l.b16 %v113
    %v393 = vunpack.c.h.b16 %v113
    %v394 = vunpack.c.l.b16 %v114
    %v395 = vunpack.c.l.b16 %v115
    %v396 = vunpack.c.h.b16 %v115
    %v397 = vunpack.c.l.b16 %v116
    %v398 = vunpack.c.l.b16 %v117
    %v399 = vunpack.c.h.b16 %v117
    %v400 = vunpack.c.l.b16 %v118
    %v401 = vunpack.c.l.b16 %v119
    %v402 = vunpack.c.h.b16 %v119
    %v403 = vunpack.c.l.b16 %v120
    %v404 = vunpack.c.l.b16 %v121
    %v405 = vunpack.c.h.b16 %v121
    %v406 = vunpack.c.l.b16 %v122
    %v407 = vunpack.c.l.b16 %v123
    %v408 = vunpack.c.h.b16 %v123
    %v409 = vunpack.c.l.b16 %v124
    %v410 = vunpack.c.l.b16 %v125
    %v411 = vunpack.c.h.b16 %v125
    %v412 = vunpack.c.l.b16 %v126
    %v413 = vunpack.c.l.b16 %v127
    %v414 = vunpack.c.h.b16 %v127
    %v415 = vunpack.c.l.b16 %v128
    %v416 = vunpack.c.l.b16 %v129
    %v417 = vunpack.c.h.b16 %v129
    %v418 = vunpack.c.l.b16 %v130
    %v419 = vunpack.c.l.b16 %v131
    %v420 = vunpack.c.h.b16 %v131
    %v421 = vunpack.c.l.b16 %v132
    %v422 = vunpack.c.l.b16 %v133
    %v423 = vunpack.c.h.b16 %v133
    %v424 = vunpack.c.l.b16 %v134
    %v425 = vunpack.c.l.b16 %v135
    %v426 = vunpack.c.h.b16 %v135
    %v427 = vunpack.c.l.b16 %v136
    %v428 = vunpack.c.l.b16 %v137
    %v429 = vunpack.c.h.b16 %v137
    %v430 = vunpack.c.l.b16 %v138
    %v431 = vunpack.c.l.b16 %v139
    %v432 = vunpack.c.h.b16 %v139
    %v433 = vunpack.c.l.b16 %v140
    %v434 = vunpack.c.l.b16 %v141
    %v435 = vunpack.c.h.b16 %v141
    %v436 = vunpack.c.l.b16 %v142
    %v437 = vunpack.c.l.b16 %v143
    %v438 = vunpack.c.h.b16 %v143
    %v439 = vunpack.c.l.b16 %v144
    %v440 = vunpack.c.l.b16 %v145
    %v441 = vunpack.c.h.b16 %v145
    %v442 = vunpack.c.l.b16 %v146
    %v443 = vunpack.c.l.b16 %v147
    %v444 = vunpack.c.h.b16 %v147
    %v445 = vunpack.c.l.b16 %v148
    %v446 = vunpack.c.l.b16 %v149
    %v447 = vunpack.c.h.b16 %v149
    %v448 = vunpack.c.l.b16 %v150
    %v449 = vunpack.c.l.b16 %v151
    %v450 = vunpack.c.h.b16 %v151
    %v451 = vunpack.c.l.b16 %v152
    %v452 = vunpack.c.l.b16 %v153
    %v453 = vunpack.c.h.b16 %v153
    %v454 = vunpack.c.l.b16 %v154
    %v455 = vunpack.c.l.b16 %v155
    %v456 = vunpack.c.h.b16 %v155
    %v457 = vunpack.c.l.b16 %v156
    %v458 = vunpack.c.l.b16 %v157
    %v459 = vunpack.c.h.b16 %v157
    %v460 = vunpack.c.l.b16 %v158
    %v461 = vunpack.c.l.b16 %v159
    %v462 = vunpack.c.h.b16 %v159
    %v463 = vunpack.c.l.b16 %v160
    %v464 = vpack.c.b16 %v323, %v320
    %v465 = vpack.c.b16 %v324, %v321
    %v466 = vpack.c.b16 %v325, %v322
    %v467 = vpack.c.b16 %v329, %v326
    %v468 = vpack.c.b16 %v330, %v327
    %v469 = vpack.c.b16 %v331, %v328
    %v470 = vpack.c.b16 %v335, %v332
    %v471 = vpack.c.b16 %v336, %v333
    %v472 = vpack.c.b16 %v337, %v334
    %v473 = vpack.c.b16 %v341, %v338
    %v474 = vpack.c.b16 %v342, %v339
    %v475 = vpack.c.b16 %v343, %v340
    %v476 = vpack.c.b16 %v347, %v344
    %v477 = vpack.c.b16 %v348, %v345
    %v478 = vpack.c.b16 %v349, %v346
    %v479 = vpack.c.b16 %v353, %v350
    %v480 = vpack.c.b16 %v354, %v351
    %v481 = vpack.c.b16 %v355, %v352
    %v482 = vpack.c.b16 %v359, %v356
    %v483 = vpack.c.b16 %v360, %v357
    %v484 = vpack.c.b16 %v361, %v358
    %v485 = vpack.c.b16 %v365, %v362
    %v486 = vpack.c.b16 %v366, %v363
    %v487 = vpack.c.b16 %v367, %v364
    %v488 = vpack.c.b16 %v371, %v368
    %v489 = vpack.c.b16 %v372, %v369
    %v490 = vpack.c.b16 %v373, %v370
    %v491 = vpack.c.b16 %v377, %v374
    %v492 = vpack.c.b16 %v378, %v375
    %v493 = vpack.c.b16 %v379, %v376
    %v494 = vpack.c.b16 %v383, %v380
    %v495 = vpack.c.b16 %v384, %v381
    %v496 = vpack.c.b16 %v385, %v382
    %v497 = vpack.c.b16 %v389, %v386
    %v498 = vpack.c.b16 %v390, %v387
    %v499 = vpack.c.b16 %v391, %v388
    %v500 = vpack.c.b16 %v395, %v392
    %v501 = vpack.c.b16 %v396, %v393
    %v502 = vpack.c.b16 %v397, %v394
    %v503 = vpack.c.b16 %v401, %v398
    %v504 = vpack.c.b16 %v402, %v399
    %v505 = vpack.c.b16 %v403, %v400
    %v506 = vpack.c.b16 %v407, %v404
    %v507 = vpack.c.b16 %v408, %v405
    %v508 = vpack.c.b16 %v409, %v406
    %v509 = vpack.c.b16 %v413, %v410
    %v510 = vpack.c.b16 %v414, %v411
    %v511 = vpack.c.b16 %v415, %v412
    %v512 = vpack.c.b16 %v419, %v416
    %v513 = vpack.c.b16 %v420, %v417
    %v514 = vpack.c.b16 %v421, %v418
    %v515 = vpack.c.b16 %v425, %v422
    %v516 = vpack.c.b16 %v426, %v423
    %v517 = vpack.c.b16 %v427, %v424
    %v518 = vpack.c.b16 %v431, %v428
    %v519 = vpack.c.b16 %v432, %v429
    %v520 = vpack.c.b16 %v433, %v430
    %v521 = vpack.c.b16 %v437, %v434
    %v522 = vpack.c.b16 %v438, %v435
    %v523 = vpack.c.b16 %v439, %v436
    %v524 = vpack.c.b16 %v443, %v440
    %v525 = vpack.c.b16 %v444, %v441
    %v526 = vpack.c.b16 %v445, %v442
    %v527 = vpack.c.b16 %v449, %v446
    %v528 = vpack.c.b16 %v450, %v447
    %v529 = vpack.c.b16 %v451, %v448
    %v530 = vpack.c.b16 %v455, %v452
    %v531 = vpack.c.b16 %v456, %v453
    %v532 = vpack.c.b16 %v457, %v454
    %v533 = vpack.c.b16 %v461, %v458
    %v534 = vpack.c.b16 %v462, %v459
    %v535 = vpack.c.b16 %v463, %v460
    %vm584 = vcmask 523264
    %v586 = vsel %vm584, %v211, 0
    %v589 = vsel %vm584, %v214, 0
    %v592 = vsel %vm584, %v217, 0
    %v595 = vsel %vm584, %v466, 0
    %v598 = vsel %vm584, %v469, 0
    %v601 = vsel %vm584, %v472, 0
    %v604 = vsel %vm584, %v475, 0
    %v607 = vsel %vm584, %v478, 0
    %v610 = vsel %vm584, %v481, 0
    %v613 = vsel %vm584, %v484, 0
    %v616 = vsel %vm584, %v487, 0
    %v619 = vsel %vm584, %v490, 0
    %v622 = vsel %vm584, %v493, 0
    %v625 = vsel %vm584, %v496, 0
    %v628 = vsel %vm584, %v499, 0
    %v631 = vsel %vm584, %v502, 0
    %v634 = vsel %vm584, %v505, 0
    %v637 = vsel %vm584, %v508, 0
    %v640 = vsel %vm584, %v511, 0
    %v643 = vsel %vm584, %v514, 0
    %v646 = vsel %vm584, %v517, 0
    %v649 = vsel %vm584, %v520, 0
    %v652 = vsel %vm584, %v523, 0
    %v655 = vsel %vm584, %v526, 0
    %v658 = vsel %vm584, %v529, 0
    %v661 = vsel %vm584, %v532, 0
    %v664 = vsel %vm584, %v535, 0
    %666 = vmatprep.subr.bf16.mxu0 %v465
    %667 = vmatpush1.bf16.xpose.msra.mxu0 %v464
    %668 = vmatprep.subr.bf16.mxu0 %v468
    %669 = vmatpush1.bf16.xpose.msra.mxu0 %v467
    %670 = vmatprep.subr.bf16.mxu0 %v471
    %671 = vmatpush1.bf16.xpose.msra.mxu0 %v470
    %672 = vmatprep.subr.bf16.mxu0 %v474
    %673 = vmatpush1.bf16.xpose.msra.mxu0 %v473
    %674 = vmatprep.subr.bf16.mxu0 %v477
    %675 = vmatpush1.bf16.xpose.msra.mxu0 %v476
    %676 = vmatprep.subr.bf16.mxu0 %v480
    %677 = vmatpush1.bf16.xpose.msra.mxu0 %v479
    %678 = vmatprep.subr.bf16.mxu0 %v483
    %679 = vmatpush1.bf16.xpose.msra.mxu0 %v482
    %680 = vmatprep.subr.bf16.mxu0 %v486
    %681 = vmatpush1.bf16.xpose.msra.mxu0 %v485
    %682 = vmatprep.subr.bf16.mxu0 %v489
    %683 = vmatpush1.bf16.xpose.msra.mxu0 %v488
    %684 = vmatprep.subr.bf16.mxu0 %v492
    %685 = vmatpush1.bf16.xpose.msra.mxu0 %v491
    %686 = vmatprep.subr.bf16.mxu0 %v495
    %687 = vmatpush1.bf16.xpose.msra.mxu0 %v494
    %688 = vmatprep.subr.bf16.mxu0 %v498
    %689 = vmatpush1.bf16.xpose.msra.mxu0 %v497
    %690 = vmatprep.subr.bf16.mxu0 %v501
    %691 = vmatpush1.bf16.xpose.msra.mxu0 %v500
    %692 = vmatprep.subr.bf16.mxu0 %v504
    %693 = vmatpush1.bf16.xpose.msra.mxu0 %v503
    %694 = vmatprep.subr.bf16.mxu0 %v507
    %695 = vmatpush1.bf16.xpose.msra.mxu0 %v506
    %696 = vmatprep.subr.bf16.mxu0 %v510
    %697 = vmatpush1.bf16.xpose.msra.mxu0 %v509
    %698 = vmatprep.mubr.bf16.mxu0 %v210
    %699 = vmatmul.mubr.bf16.gmra.mrb[0].mxu0 %v209
    %v700 = vpop.f32.mrb[0].mxu0
    %v701 = vadd.f32 0.0, %v700
    %v702 = vpop.f32.mrb[0].mxu0
    %v703 = vadd.f32 0.0, %v702
    %v704 = vpop.f32.mrb[0].mxu0
    %v705 = vadd.f32 0.0, %v704
    %v706 = vpop.f32.mrb[0].mxu0
    %v707 = vadd.f32 0.0, %v706
    %708 = vmatprep.mubr.bf16.mxu0 %v213
    %709 = vmatmul.mubr.bf16.gmra.mrb[0].mxu0 %v212
    %v710 = vpop.f32.mrb[0].mxu0
    %v711 = vadd.f32 0.0, %v710
    %v712 = vpop.f32.mrb[0].mxu0
    %v713 = vadd.f32 0.0, %v712
    %v714 = vpop.f32.mrb[0].mxu0
    %v715 = vadd.f32 0.0, %v714
    %v716 = vpop.f32.mrb[0].mxu0
    %v717 = vadd.f32 0.0, %v716
    %718 = vmatprep.mubr.bf16.mxu0 %v216
    %719 = vmatmul.mubr.bf16.gmra.mrb[0].mxu0 %v215
    %v720 = vpop.f32.mrb[0].mxu0
    %v721 = vadd.f32 0.0, %v720
    %v722 = vpop.f32.mrb[0].mxu0
    %v723 = vadd.f32 0.0, %v722
    %v724 = vpop.f32.mrb[0].mxu0
    %v725 = vadd.f32 0.0, %v724
    %v726 = vpop.f32.mrb[0].mxu0
    %v727 = vadd.f32 0.0, %v726
    %728 = vdwg.mxu0
    %729 = vmatprep.subr.bf16.mxu0 0
    %730 = vmatpush1.bf16.xpose.msra.mxu0 %v595
    %731 = vmatprep.subr.bf16.mxu0 0
    %732 = vmatpush1.bf16.xpose.msra.mxu0 %v598
    %733 = vmatprep.subr.bf16.mxu0 0
    %734 = vmatpush1.bf16.xpose.msra.mxu0 %v601
    %735 = vmatprep.subr.bf16.mxu0 0
    %736 = vmatpush1.bf16.xpose.msra.mxu0 %v604
    %737 = vmatprep.subr.bf16.mxu0 0
    %738 = vmatpush1.bf16.xpose.msra.mxu0 %v607
    %739 = vmatprep.subr.bf16.mxu0 0
    %740 = vmatpush1.bf16.xpose.msra.mxu0 %v610
    %741 = vmatprep.subr.bf16.mxu0 0
    %742 = vmatpush1.bf16.xpose.msra.mxu0 %v613
    %743 = vmatprep.subr.bf16.mxu0 0
    %744 = vmatpush1.bf16.xpose.msra.mxu0 %v616
    %745 = vmatprep.subr.bf16.mxu0 0
    %746 = vmatpush1.bf16.xpose.msra.mxu0 %v619
    %747 = vmatprep.subr.bf16.mxu0 0
    %748 = vmatpush1.bf16.xpose.msra.mxu0 %v622
    %749 = vmatprep.subr.bf16.mxu0 0
    %750 = vmatpush1.bf16.xpose.msra.mxu0 %v625
    %751 = vmatprep.subr.bf16.mxu0 0
    %752 = vmatpush1.bf16.xpose.msra.mxu0 %v628
    %753 = vmatprep.subr.bf16.mxu0 0
    %754 = vmatpush1.bf16.xpose.msra.mxu0 %v631
    %755 = vmatprep.subr.bf16.mxu0 0
    %756 = vmatpush1.bf16.xpose.msra.mxu0 %v634
    %757 = vmatprep.subr.bf16.mxu0 0
    %758 = vmatpush1.bf16.xpose.msra.mxu0 %v637
    %759 = vmatprep.subr.bf16.mxu0 0
    %760 = vmatpush1.bf16.xpose.msra.mxu0 %v640
    %761 = vmatprep.mubr.bf16.mxu0 0
    %762 = vmatmul.mubr.bf16.gmra.mrb[0].mxu0 %v586
    %v763 = vpop.f32.mrb[0].mxu0
    %v764 = vadd.f32 %v701, %v763
    %v765 = vpop.f32.mrb[0].mxu0
    %v766 = vadd.f32 %v703, %v765
    %v767 = vpop.f32.mrb[0].mxu0
    %v768 = vadd.f32 %v705, %v767
    %v769 = vpop.f32.mrb[0].mxu0
    %v770 = vadd.f32 %v707, %v769
    %771 = vmatprep.mubr.bf16.mxu0 0
    %772 = vmatmul.mubr.bf16.gmra.mrb[0].mxu0 %v589
    %v773 = vpop.f32.mrb[0].mxu0
    %v774 = vadd.f32 %v711, %v773
    %v775 = vpop.f32.mrb[0].mxu0
    %v776 = vadd.f32 %v713, %v775
    %v777 = vpop.f32.mrb[0].mxu0
    %v778 = vadd.f32 %v715, %v777
    %v779 = vpop.f32.mrb[0].mxu0
    %v780 = vadd.f32 %v717, %v779
    %781 = vmatprep.mubr.bf16.mxu0 0
    %782 = vmatmul.mubr.bf16.gmra.mrb[0].mxu0 %v592
    %v783 = vpop.f32.mrb[0].mxu0
    %v784 = vadd.f32 %v721, %v783
    %v785 = vpop.f32.mrb[0].mxu0
    %v786 = vadd.f32 %v723, %v785
    %v787 = vpop.f32.mrb[0].mxu0
    %v788 = vadd.f32 %v725, %v787
    %v789 = vpop.f32.mrb[0].mxu0
    %v790 = vadd.f32 %v727, %v789
    %791 = vdwg.mxu0
    %792 = vmatprep.subr.bf16.mxu0 %v513
    %793 = vmatpush1.bf16.xpose.msra.mxu0 %v512
    %794 = vmatprep.subr.bf16.mxu0 %v516
    %795 = vmatpush1.bf16.xpose.msra.mxu0 %v515
    %796 = vmatprep.subr.bf16.mxu0 %v519
    %797 = vmatpush1.bf16.xpose.msra.mxu0 %v518
    %798 = vmatprep.subr.bf16.mxu0 %v522
    %799 = vmatpush1.bf16.xpose.msra.mxu0 %v521
    %800 = vmatprep.subr.bf16.mxu0 %v525
    %801 = vmatpush1.bf16.xpose.msra.mxu0 %v524
    %802 = vmatprep.subr.bf16.mxu0 %v528
    %803 = vmatpush1.bf16.xpose.msra.mxu0 %v527
    %804 = vmatprep.subr.bf16.mxu0 %v531
    %805 = vmatpush1.bf16.xpose.msra.mxu0 %v530
    %806 = vmatprep.subr.bf16.mxu0 %v534
    %807 = vmatpush1.bf16.xpose.msra.mxu0 %v533
    %808 = vmatprep.subr.bf16.mxu0 0
    %809 = vmatpush1.bf16.xpose.msra.mxu0 0
    %810 = vmatprep.subr.bf16.mxu0 0
    %811 = vmatpush1.bf16.xpose.msra.mxu0 0
    %812 = vmatprep.subr.bf16.mxu0 0
    %813 = vmatpush1.bf16.xpose.msra.mxu0 0
    %814 = vmatprep.subr.bf16.mxu0 0
    %815 = vmatpush1.bf16.xpose.msra.mxu0 0
    %816 = vmatprep.subr.bf16.mxu0 0
    %817 = vmatpush1.bf16.xpose.msra.mxu0 0
    %818 = vmatprep.subr.bf16.mxu0 0
    %819 = vmatpush1.bf16.xpose.msra.mxu0 0
    %820 = vmatprep.subr.bf16.mxu0 0
    %821 = vmatpush1.bf16.xpose.msra.mxu0 0
    %822 = vmatprep.subr.bf16.mxu0 0
    %823 = vmatpush1.bf16.xpose.msra.mxu0 0
    %824 = vmatprep.mubr.bf16.mxu0 %v210
    %825 = vmatmul.mubr.bf16.gmra.mrb[0].mxu0 %v209
    %v826 = vpop.f32.mrb[0].mxu0
    %v827 = vadd.f32 0.0, %v826
    %v828 = vpop.f32.mrb[0].mxu0
    %v829 = vpop.f32.mrb[0].mxu0
    %v830 = vadd.f32 0.0, %v829
    %v831 = vpop.f32.mrb[0].mxu0
    %832 = vmatprep.mubr.bf16.mxu0 %v213
    %833 = vmatmul.mubr.bf16.gmra.mrb[0].mxu0 %v212
    %v834 = vpop.f32.mrb[0].mxu0
    %v835 = vadd.f32 0.0, %v834
    %v836 = vpop.f32.mrb[0].mxu0
    %v837 = vpop.f32.mrb[0].mxu0
    %v838 = vadd.f32 0.0, %v837
    %v839 = vpop.f32.mrb[0].mxu0
    %840 = vmatprep.mubr.bf16.mxu0 %v216
    %841 = vmatmul.mubr.bf16.gmra.mrb[0].mxu0 %v215
    %v842 = vpop.f32.mrb[0].mxu0
    %v843 = vadd.f32 0.0, %v842
    %v844 = vpop.f32.mrb[0].mxu0
    %v845 = vpop.f32.mrb[0].mxu0
    %v846 = vadd.f32 0.0, %v845
    %v847 = vpop.f32.mrb[0].mxu0
    %848 = vdwg.mxu0
    %849 = vmatprep.subr.bf16.mxu0 0
    %850 = vmatpush1.bf16.xpose.msra.mxu0 %v643
    %851 = vmatprep.subr.bf16.mxu0 0
    %852 = vmatpush1.bf16.xpose.msra.mxu0 %v646
    %853 = vmatprep.subr.bf16.mxu0 0
    %854 = vmatpush1.bf16.xpose.msra.mxu0 %v649
    %855 = vmatprep.subr.bf16.mxu0 0
    %856 = vmatpush1.bf16.xpose.msra.mxu0 %v652
    %857 = vmatprep.subr.bf16.mxu0 0
    %858 = vmatpush1.bf16.xpose.msra.mxu0 %v655
    %859 = vmatprep.subr.bf16.mxu0 0
    %860 = vmatpush1.bf16.xpose.msra.mxu0 %v658
    %861 = vmatprep.subr.bf16.mxu0 0
    %862 = vmatpush1.bf16.xpose.msra.mxu0 %v661
    %863 = vmatprep.subr.bf16.mxu0 0
    %864 = vmatpush1.bf16.xpose.msra.mxu0 %v664
    %865 = vmatprep.subr.bf16.mxu0 0
    %866 = vmatpush1.bf16.xpose.msra.mxu0 0
    %867 = vmatprep.subr.bf16.mxu0 0
    %868 = vmatpush1.bf16.xpose.msra.mxu0 0
    %869 = vmatprep.subr.bf16.mxu0 0
    %870 = vmatpush1.bf16.xpose.msra.mxu0 0
    %871 = vmatprep.subr.bf16.mxu0 0
    %872 = vmatpush1.bf16.xpose.msra.mxu0 0
    %873 = vmatprep.subr.bf16.mxu0 0
    %874 = vmatpush1.bf16.xpose.msra.mxu0 0
    %875 = vmatprep.subr.bf16.mxu0 0
    %876 = vmatpush1.bf16.xpose.msra.mxu0 0
    %877 = vmatprep.subr.bf16.mxu0 0
    %878 = vmatpush1.bf16.xpose.msra.mxu0 0
    %879 = vmatprep.subr.bf16.mxu0 0
    %880 = vmatpush1.bf16.xpose.msra.mxu0 0
    %881 = vmatprep.mubr.bf16.mxu0 0
    %882 = vmatmul.mubr.bf16.gmra.mrb[0].mxu0 %v586
    %v883 = vpop.f32.mrb[0].mxu0
    %v884 = vadd.f32 %v827, %v883
    %v885 = vpop.f32.mrb[0].mxu0
    %v886 = vpop.f32.mrb[0].mxu0
    %v887 = vadd.f32 %v830, %v886
    %v888 = vpop.f32.mrb[0].mxu0
    %889 = vmatprep.mubr.bf16.mxu0 0
    %890 = vmatmul.mubr.bf16.gmra.mrb[0].mxu0 %v589
    %v891 = vpop.f32.mrb[0].mxu0
    %v892 = vadd.f32 %v835, %v891
    %v893 = vpop.f32.mrb[0].mxu0
    %v894 = vpop.f32.mrb[0].mxu0
    %v895 = vadd.f32 %v838, %v894
    %v896 = vpop.f32.mrb[0].mxu0
    %897 = vmatprep.mubr.bf16.mxu0 0
    %898 = vmatmul.mubr.bf16.gmra.mrb[0].mxu0 %v592
    %v899 = vpop.f32.mrb[0].mxu0
    %v900 = vadd.f32 %v843, %v899
    %v901 = vpop.f32.mrb[0].mxu0
    %v902 = vpop.f32.mrb[0].mxu0
    %v903 = vadd.f32 %v846, %v902
    %v904 = vpop.f32.mrb[0].mxu0
    %905 = vdwg.mxu0
    %v906 = vadd.f32 %v161, %v764
    %v907 = vadd.f32 %v162, %v766
    %v908 = vadd.f32 %v163, %v884
    %v909 = vadd.f32 %v164, %v768
    %v910 = vadd.f32 %v165, %v770
    %v911 = vadd.f32 %v166, %v887
    %v912 = vadd.f32 %v167, %v774
    %v913 = vadd.f32 %v168, %v776
    %v914 = vadd.f32 %v169, %v892
    %v915 = vadd.f32 %v170, %v778
    %v916 = vadd.f32 %v171, %v780
    %v917 = vadd.f32 %v172, %v895
    %v918 = vadd.f32 %v173, %v784
    %v919 = vadd.f32 %v174, %v786
    %v920 = vadd.f32 %v175, %v900
    %v921 = vadd.f32 %v176, %v788
    %v922 = vadd.f32 %v177, %v790
    %v923 = vadd.f32 %v178, %v903
    %924 = vst [vmem:[#allocation2] sm:$0xff] %v906
    %925 = vst [vmem:[#allocation2 + $0x8] sm:$0xff] %v907
    %926 = vst [vmem:[#allocation2 + $0x10] sm:$0xff] %v908
    %927 = vst [vmem:[#allocation2 + $0x18] sm:$0xff] %v909
    %928 = vst [vmem:[#allocation2 + $0x20] sm:$0xff] %v910
    %929 = vst [vmem:[#allocation2 + $0x28] sm:$0xff] %v911
    %930 = vst [vmem:[#allocation2 + $0x30] sm:$0xff] %v912
    %931 = vst [vmem:[#allocation2 + $0x38] sm:$0xff] %v913
    %932 = vst [vmem:[#allocation2 + $0x40] sm:$0xff] %v914
    %933 = vst [vmem:[#allocation2 + $0x48] sm:$0xff] %v915
    %934 = vst [vmem:[#allocation2 + $0x50] sm:$0xff] %v916
    %935 = vst [vmem:[#allocation2 + $0x58] sm:$0xff] %v917
    %936 = vst [vmem:[#allocation2 + $0x60] sm:$0xff] %v918
    %937 = vst [vmem:[#allocation2 + $0x68] sm:$0xff] %v919
    %938 = vst [vmem:[#allocation2 + $0x70] sm:$0xff] %v920
    %939 = vst [vmem:[#allocation2 + $0x78] sm:$0xff] %v921
    %940 = vst [vmem:[#allocation2 + $0x80] sm:$0xff] %v922
    %941 = vst [vmem:[#allocation2 + $0x88] sm:$0xff] %v923
    %v942 = vunpack.c.l.bf16 %v53
    %v943 = vunpack.c.h.bf16 %v53
    %v944 = vunpack.c.l.bf16 %v54
    %v945 = vunpack.c.l.bf16 %v55
    %v946 = vunpack.c.h.bf16 %v55
    %v947 = vunpack.c.l.bf16 %v56
    %v948 = vunpack.c.l.bf16 %v57
    %v949 = vunpack.c.h.bf16 %v57
    %v950 = vunpack.c.l.bf16 %v58
    %v951 = vunpack.c.l.bf16 %v59
    %v952 = vunpack.c.h.bf16 %v59
    %v953 = vunpack.c.l.bf16 %v60
    %v954 = vunpack.c.l.bf16 %v61
    %v955 = vunpack.c.h.bf16 %v61
    %v956 = vunpack.c.l.bf16 %v62
    %v957 = vunpack.c.l.bf16 %v63
    %v958 = vunpack.c.h.bf16 %v63
    %v959 = vunpack.c.l.bf16 %v64
    %v960 = vld [vmem:[#allocation3] sm:$0xff]
    %v961 = vld [vmem:[#allocation3 + $0x8] sm:$0xff]
    %v962 = vld [vmem:[#allocation3 + $0x10] sm:$0xff]
    %v963 = vld [vmem:[#allocation3 + $0x18] sm:$0xff]
    %v964 = vld [vmem:[#allocation3 + $0x20] sm:$0xff]
    %v965 = vld [vmem:[#allocation3 + $0x28] sm:$0xff]
    %v966 = vmul.f32 %v942, %v942
    %v967 = vmul.f32 %v943, %v943
    %v968 = vmul.f32 %v944, %v944
    %v969 = vmul.f32 %v945, %v945
    %v970 = vmul.f32 %v946, %v946
    %v971 = vmul.f32 %v947, %v947
    %v972 = vmul.f32 %v948, %v948
    %v973 = vmul.f32 %v949, %v949
    %v974 = vmul.f32 %v950, %v950
    %v975 = vmul.f32 %v951, %v951
    %v976 = vmul.f32 %v952, %v952
    %v977 = vmul.f32 %v953, %v953
    %v978 = vmul.f32 %v954, %v954
    %v979 = vmul.f32 %v955, %v955
    %v980 = vmul.f32 %v956, %v956
    %v981 = vmul.f32 %v957, %v957
    %v982 = vmul.f32 %v958, %v958
    %v983 = vmul.f32 %v959, %v959
    %v984 = vadd.f32 %v966, %v967
    %v985 = vsel %vm584, %v968, 0.0
    %v986 = vadd.f32 %v984, %v985
    %987 = vadd.xlane.f32.xlu0 %v986
    %v988 = vpop.xlane.xlu0 %987
    %v989 = vadd.f32 %v969, %v970
    %v990 = vsel %vm584, %v971, 0.0
    %v991 = vadd.f32 %v989, %v990
    %992 = vadd.xlane.f32.xlu0 %v991
    %v993 = vpop.xlane.xlu0 %992
    %v994 = vadd.f32 %v972, %v973
    %v995 = vsel %vm584, %v974, 0.0
    %v996 = vadd.f32 %v994, %v995
    %997 = vadd.xlane.f32.xlu0 %v996
    %v998 = vpop.xlane.xlu0 %997
    %v999 = vadd.f32 %v975, %v976
    %v1000 = vsel %vm584, %v977, 0.0
    %v1001 = vadd.f32 %v999, %v1000
    %1002 = vadd.xlane.f32.xlu0 %v1001
    %v1003 = vpop.xlane.xlu0 %1002
    %v1004 = vadd.f32 %v978, %v979
    %v1005 = vsel %vm584, %v980, 0.0
    %v1006 = vadd.f32 %v1004, %v1005
    %1007 = vadd.xlane.f32.xlu0 %v1006
    %v1008 = vpop.xlane.xlu0 %1007
    %v1009 = vadd.f32 %v981, %v982
    %v1010 = vsel %vm584, %v983, 0.0
    %v1011 = vadd.f32 %v1009, %v1010
    %1012 = vadd.xlane.f32.xlu0 %v1011
    %v1013 = vpop.xlane.xlu0 %1012
    %v1014 = vadd.f32 %v960, %v988
    %v1015 = vadd.f32 %v961, %v993
    %v1016 = vadd.f32 %v962, %v998
    %v1017 = vadd.f32 %v963, %v1003
    %v1018 = vadd.f32 %v964, %v1008
    %v1019 = vadd.f32 %v965, %v1013
    %vm1020 = vcmask 7168
    %1021 = vst.msk [vmem:[#allocation3] sm:$0xff] %vm1020, %v1014
    %1022 = vst.msk [vmem:[#allocation3 + $0x8] sm:$0xff] %vm1020, %v1015
    %1023 = vst.msk [vmem:[#allocation3 + $0x10] sm:$0xff] %vm1020, %v1016
    %1024 = vst.msk [vmem:[#allocation3 + $0x18] sm:$0xff] %vm1020, %v1017
    %1025 = vst.msk [vmem:[#allocation3 + $0x20] sm:$0xff] %vm1020, %v1018
    %1026 = vst.msk [vmem:[#allocation3 + $0x28] sm:$0xff] %vm1020, %v1019
    // Predicated region
    $region18: #{tpu_custom_call.1} parent=1 // pred_check
      %p1027 = pneg %p43
    $region19: #{tpu_custom_call.1} parent=1 // pred_check_branch
      %1029 = sbr.rel (%p1027) target = $region21
    $region20: #{tpu_custom_call.1} parent=1 // pred_region
      %v1030 = vld [vmem:[#allocation4] sm:$0x7]
      %v1031 = vmul.bf16 %v65, %v65
      %v1032 = vmul.bf16 %v66, %v66
      %v1033 = vmul.bf16 %v67, %v67
      %v1034 = vmul.bf16 %v68, %v68
      %v1035 = vmul.bf16 %v69, %v69
      %v1036 = vmul.bf16 %v70, %v70
      %v1037 = vmul.bf16 %v71, %v71
      %v1038 = vmul.bf16 %v72, %v72
      %v1039 = vmul.bf16 %v73, %v73
      %v1040 = vmul.bf16 %v74, %v74
      %v1041 = vmul.bf16 %v75, %v75
      %v1042 = vmul.bf16 %v76, %v76
      %v1043 = vmul.bf16 %v77, %v77
      %v1044 = vmul.bf16 %v78, %v78
      %v1045 = vmul.bf16 %v79, %v79
      %v1046 = vmul.bf16 %v80, %v80
      %v1047 = vmul.bf16 %v81, %v81
      %v1048 = vmul.bf16 %v82, %v82
      %v1049 = vmul.bf16 %v83, %v83
      %v1050 = vmul.bf16 %v84, %v84
      %v1051 = vmul.bf16 %v85, %v85
      %v1052 = vmul.bf16 %v86, %v86
      %v1053 = vmul.bf16 %v87, %v87
      %v1054 = vmul.bf16 %v88, %v88
      %v1055 = vmul.bf16 %v89, %v89
      %v1056 = vmul.bf16 %v90, %v90
      %v1057 = vmul.bf16 %v91, %v91
      %v1058 = vmul.bf16 %v92, %v92
      %v1059 = vmul.bf16 %v93, %v93
      %v1060 = vmul.bf16 %v94, %v94
      %v1061 = vmul.bf16 %v95, %v95
      %v1062 = vmul.bf16 %v96, %v96
      %v1063 = vmul.bf16 %v97, %v97
      %v1064 = vmul.bf16 %v98, %v98
      %v1065 = vmul.bf16 %v99, %v99
      %v1066 = vmul.bf16 %v100, %v100
      %v1067 = vmul.bf16 %v101, %v101
      %v1068 = vmul.bf16 %v102, %v102
      %v1069 = vmul.bf16 %v103, %v103
      %v1070 = vmul.bf16 %v104, %v104
      %v1071 = vmul.bf16 %v105, %v105
      %v1072 = vmul.bf16 %v106, %v106
      %v1073 = vmul.bf16 %v107, %v107
      %v1074 = vmul.bf16 %v108, %v108
      %v1075 = vmul.bf16 %v109, %v109
      %v1076 = vmul.bf16 %v110, %v110
      %v1077 = vmul.bf16 %v111, %v111
      %v1078 = vmul.bf16 %v112, %v112
      %v1079 = vmul.bf16 %v113, %v113
      %v1080 = vmul.bf16 %v114, %v114
      %v1081 = vmul.bf16 %v115, %v115
      %v1082 = vmul.bf16 %v116, %v116
      %v1083 = vmul.bf16 %v117, %v117
      %v1084 = vmul.bf16 %v118, %v118
      %v1085 = vmul.bf16 %v119, %v119
      %v1086 = vmul.bf16 %v120, %v120
      %v1087 = vmul.bf16 %v121, %v121
      %v1088 = vmul.bf16 %v122, %v122
      %v1089 = vmul.bf16 %v123, %v123
      %v1090 = vmul.bf16 %v124, %v124
      %v1091 = vmul.bf16 %v125, %v125
      %v1092 = vmul.bf16 %v126, %v126
      %v1093 = vmul.bf16 %v127, %v127
      %v1094 = vmul.bf16 %v128, %v128
      %v1095 = vmul.bf16 %v129, %v129
      %v1096 = vmul.bf16 %v130, %v130
      %v1097 = vmul.bf16 %v131, %v131
      %v1098 = vmul.bf16 %v132, %v132
      %v1099 = vmul.bf16 %v133, %v133
      %v1100 = vmul.bf16 %v134, %v134
      %v1101 = vmul.bf16 %v135, %v135
      %v1102 = vmul.bf16 %v136, %v136
      %v1103 = vmul.bf16 %v137, %v137
      %v1104 = vmul.bf16 %v138, %v138
      %v1105 = vmul.bf16 %v139, %v139
      %v1106 = vmul.bf16 %v140, %v140
      %v1107 = vmul.bf16 %v141, %v141
      %v1108 = vmul.bf16 %v142, %v142
      %v1109 = vmul.bf16 %v143, %v143
      %v1110 = vmul.bf16 %v144, %v144
      %v1111 = vmul.bf16 %v145, %v145
      %v1112 = vmul.bf16 %v146, %v146
      %v1113 = vmul.bf16 %v147, %v147
      %v1114 = vmul.bf16 %v148, %v148
      %v1115 = vmul.bf16 %v149, %v149
      %v1116 = vmul.bf16 %v150, %v150
      %v1117 = vmul.bf16 %v151, %v151
      %v1118 = vmul.bf16 %v152, %v152
      %v1119 = vmul.bf16 %v153, %v153
      %v1120 = vmul.bf16 %v154, %v154
      %v1121 = vmul.bf16 %v155, %v155
      %v1122 = vmul.bf16 %v156, %v156
      %v1123 = vmul.bf16 %v157, %v157
      %v1124 = vmul.bf16 %v158, %v158
      %v1125 = vmul.bf16 %v159, %v159
      %v1126 = vmul.bf16 %v160, %v160
      %v1223 = vunpack.c.l.b16 %v1031
      %v1224 = vunpack.c.h.b16 %v1031
      %v1225 = vunpack.c.l.b16 %v1032
      %v1226 = vunpack.c.l.b16 %v1033
      %v1227 = vunpack.c.h.b16 %v1033
      %v1228 = vunpack.c.l.b16 %v1034
      %v1229 = vunpack.c.l.b16 %v1035
      %v1230 = vunpack.c.h.b16 %v1035
      %v1231 = vunpack.c.l.b16 %v1036
      %v1232 = vunpack.c.l.b16 %v1037
      %v1233 = vunpack.c.h.b16 %v1037
      %v1234 = vunpack.c.l.b16 %v1038
      %v1235 = vunpack.c.l.b16 %v1039
      %v1236 = vunpack.c.h.b16 %v1039
      %v1237 = vunpack.c.l.b16 %v1040
      %v1238 = vunpack.c.l.b16 %v1041
      %v1239 = vunpack.c.h.b16 %v1041
      %v1240 = vunpack.c.l.b16 %v1042
      %v1241 = vunpack.c.l.b16 %v1043
      %v1242 = vunpack.c.h.b16 %v1043
      %v1243 = vunpack.c.l.b16 %v1044
      %v1244 = vunpack.c.l.b16 %v1045
      %v1245 = vunpack.c.h.b16 %v1045
      %v1246 = vunpack.c.l.b16 %v1046
      %v1247 = vunpack.c.l.b16 %v1047
      %v1248 = vunpack.c.h.b16 %v1047
      %v1249 = vunpack.c.l.b16 %v1048
      %v1250 = vunpack.c.l.b16 %v1049
      %v1251 = vunpack.c.h.b16 %v1049
      %v1252 = vunpack.c.l.b16 %v1050
      %v1253 = vunpack.c.l.b16 %v1051
      %v1254 = vunpack.c.h.b16 %v1051
      %v1255 = vunpack.c.l.b16 %v1052
      %v1256 = vunpack.c.l.b16 %v1053
      %v1257 = vunpack.c.h.b16 %v1053
      %v1258 = vunpack.c.l.b16 %v1054
      %v1259 = vunpack.c.l.b16 %v1055
      %v1260 = vunpack.c.h.b16 %v1055
      %v1261 = vunpack.c.l.b16 %v1056
      %v1262 = vunpack.c.l.b16 %v1057
      %v1263 = vunpack.c.h.b16 %v1057
      %v1264 = vunpack.c.l.b16 %v1058
      %v1265 = vunpack.c.l.b16 %v1059
      %v1266 = vunpack.c.h.b16 %v1059
      %v1267 = vunpack.c.l.b16 %v1060
      %v1268 = vunpack.c.l.b16 %v1061
      %v1269 = vunpack.c.h.b16 %v1061
      %v1270 = vunpack.c.l.b16 %v1062
      %v1271 = vunpack.c.l.b16 %v1063
      %v1272 = vunpack.c.h.b16 %v1063
      %v1273 = vunpack.c.l.b16 %v1064
      %v1274 = vunpack.c.l.b16 %v1065
      %v1275 = vunpack.c.h.b16 %v1065
      %v1276 = vunpack.c.l.b16 %v1066
      %v1277 = vunpack.c.l.b16 %v1067
      %v1278 = vunpack.c.h.b16 %v1067
      %v1279 = vunpack.c.l.b16 %v1068
      %v1280 = vunpack.c.l.b16 %v1069
      %v1281 = vunpack.c.h.b16 %v1069
      %v1282 = vunpack.c.l.b16 %v1070
      %v1283 = vunpack.c.l.b16 %v1071
      %v1284 = vunpack.c.h.b16 %v1071
      %v1285 = vunpack.c.l.b16 %v1072
      %v1286 = vunpack.c.l.b16 %v1073
      %v1287 = vunpack.c.h.b16 %v1073
      %v1288 = vunpack.c.l.b16 %v1074
      %v1289 = vunpack.c.l.b16 %v1075
      %v1290 = vunpack.c.h.b16 %v1075
      %v1291 = vunpack.c.l.b16 %v1076
      %v1292 = vunpack.c.l.b16 %v1077
      %v1293 = vunpack.c.h.b16 %v1077
      %v1294 = vunpack.c.l.b16 %v1078
      %v1295 = vunpack.c.l.b16 %v1079
      %v1296 = vunpack.c.h.b16 %v1079
      %v1297 = vunpack.c.l.b16 %v1080
      %v1298 = vunpack.c.l.b16 %v1081
      %v1299 = vunpack.c.h.b16 %v1081
      %v1300 = vunpack.c.l.b16 %v1082
      %v1301 = vunpack.c.l.b16 %v1083
      %v1302 = vunpack.c.h.b16 %v1083
      %v1303 = vunpack.c.l.b16 %v1084
      %v1304 = vunpack.c.l.b16 %v1085
      %v1305 = vunpack.c.h.b16 %v1085
      %v1306 = vunpack.c.l.b16 %v1086
      %v1307 = vunpack.c.l.b16 %v1087
      %v1308 = vunpack.c.h.b16 %v1087
      %v1309 = vunpack.c.l.b16 %v1088
      %v1310 = vunpack.c.l.b16 %v1089
      %v1311 = vunpack.c.h.b16 %v1089
      %v1312 = vunpack.c.l.b16 %v1090
      %v1313 = vunpack.c.l.b16 %v1091
      %v1314 = vunpack.c.h.b16 %v1091
      %v1315 = vunpack.c.l.b16 %v1092
      %v1316 = vunpack.c.l.b16 %v1093
      %v1317 = vunpack.c.h.b16 %v1093
      %v1318 = vunpack.c.l.b16 %v1094
      %v1319 = vunpack.c.l.b16 %v1095
      %v1320 = vunpack.c.h.b16 %v1095
      %v1321 = vunpack.c.l.b16 %v1096
      %v1322 = vunpack.c.l.b16 %v1097
      %v1323 = vunpack.c.h.b16 %v1097
      %v1324 = vunpack.c.l.b16 %v1098
      %v1325 = vunpack.c.l.b16 %v1099
      %v1326 = vunpack.c.h.b16 %v1099
      %v1327 = vunpack.c.l.b16 %v1100
      %v1328 = vunpack.c.l.b16 %v1101
      %v1329 = vunpack.c.h.b16 %v1101
      %v1330 = vunpack.c.l.b16 %v1102
      %v1331 = vunpack.c.l.b16 %v1103
      %v1332 = vunpack.c.h.b16 %v1103
      %v1333 = vunpack.c.l.b16 %v1104
      %v1334 = vunpack.c.l.b16 %v1105
      %v1335 = vunpack.c.h.b16 %v1105
      %v1336 = vunpack.c.l.b16 %v1106
      %v1337 = vunpack.c.l.b16 %v1107
      %v1338 = vunpack.c.h.b16 %v1107
      %v1339 = vunpack.c.l.b16 %v1108
      %v1340 = vunpack.c.l.b16 %v1109
      %v1341 = vunpack.c.h.b16 %v1109
      %v1342 = vunpack.c.l.b16 %v1110
      %v1343 = vunpack.c.l.b16 %v1111
      %v1344 = vunpack.c.h.b16 %v1111
      %v1345 = vunpack.c.l.b16 %v1112
      %v1346 = vunpack.c.l.b16 %v1113
      %v1347 = vunpack.c.h.b16 %v1113
      %v1348 = vunpack.c.l.b16 %v1114
      %v1349 = vunpack.c.l.b16 %v1115
      %v1350 = vunpack.c.h.b16 %v1115
      %v1351 = vunpack.c.l.b16 %v1116
      %v1352 = vunpack.c.l.b16 %v1117
      %v1353 = vunpack.c.h.b16 %v1117
      %v1354 = vunpack.c.l.b16 %v1118
      %v1355 = vunpack.c.l.b16 %v1119
      %v1356 = vunpack.c.h.b16 %v1119
      %v1357 = vunpack.c.l.b16 %v1120
      %v1358 = vunpack.c.l.b16 %v1121
      %v1359 = vunpack.c.h.b16 %v1121
      %v1360 = vunpack.c.l.b16 %v1122
      %v1361 = vunpack.c.l.b16 %v1123
      %v1362 = vunpack.c.h.b16 %v1123
      %v1363 = vunpack.c.l.b16 %v1124
      %v1364 = vunpack.c.l.b16 %v1125
      %v1365 = vunpack.c.h.b16 %v1125
      %v1366 = vunpack.c.l.b16 %v1126
      %v1367 = vpack.c.b16 %v1226, %v1223
      %v1368 = vpack.c.b16 %v1227, %v1224
      %v1369 = vpack.c.b16 %v1228, %v1225
      %v1370 = vpack.c.b16 %v1232, %v1229
      %v1371 = vpack.c.b16 %v1233, %v1230
      %v1372 = vpack.c.b16 %v1234, %v1231
      %v1373 = vpack.c.b16 %v1238, %v1235
      %v1374 = vpack.c.b16 %v1239, %v1236
      %v1375 = vpack.c.b16 %v1240, %v1237
      %v1376 = vpack.c.b16 %v1244, %v1241
      %v1377 = vpack.c.b16 %v1245, %v1242
      %v1378 = vpack.c.b16 %v1246, %v1243
      %v1379 = vpack.c.b16 %v1250, %v1247
      %v1380 = vpack.c.b16 %v1251, %v1248
      %v1381 = vpack.c.b16 %v1252, %v1249
      %v1382 = vpack.c.b16 %v1256, %v1253
      %v1383 = vpack.c.b16 %v1257, %v1254
      %v1384 = vpack.c.b16 %v1258, %v1255
      %v1385 = vpack.c.b16 %v1262, %v1259
      %v1386 = vpack.c.b16 %v1263, %v1260
      %v1387 = vpack.c.b16 %v1264, %v1261
      %v1388 = vpack.c.b16 %v1268, %v1265
      %v1389 = vpack.c.b16 %v1269, %v1266
      %v1390 = vpack.c.b16 %v1270, %v1267
      %v1391 = vpack.c.b16 %v1274, %v1271
      %v1392 = vpack.c.b16 %v1275, %v1272
      %v1393 = vpack.c.b16 %v1276, %v1273
      %v1394 = vpack.c.b16 %v1280, %v1277
      %v1395 = vpack.c.b16 %v1281, %v1278
      %v1396 = vpack.c.b16 %v1282, %v1279
      %v1397 = vpack.c.b16 %v1286, %v1283
      %v1398 = vpack.c.b16 %v1287, %v1284
      %v1399 = vpack.c.b16 %v1288, %v1285
      %v1400 = vpack.c.b16 %v1292, %v1289
      %v1401 = vpack.c.b16 %v1293, %v1290
      %v1402 = vpack.c.b16 %v1294, %v1291
      %v1403 = vpack.c.b16 %v1298, %v1295
      %v1404 = vpack.c.b16 %v1299, %v1296
      %v1405 = vpack.c.b16 %v1300, %v1297
      %v1406 = vpack.c.b16 %v1304, %v1301
      %v1407 = vpack.c.b16 %v1305, %v1302
      %v1408 = vpack.c.b16 %v1306, %v1303
      %v1409 = vpack.c.b16 %v1310, %v1307
      %v1410 = vpack.c.b16 %v1311, %v1308
      %v1411 = vpack.c.b16 %v1312, %v1309
      %v1412 = vpack.c.b16 %v1316, %v1313
      %v1413 = vpack.c.b16 %v1317, %v1314
      %v1414 = vpack.c.b16 %v1318, %v1315
      %v1415 = vpack.c.b16 %v1322, %v1319
      %v1416 = vpack.c.b16 %v1323, %v1320
      %v1417 = vpack.c.b16 %v1324, %v1321
      %v1418 = vpack.c.b16 %v1328, %v1325
      %v1419 = vpack.c.b16 %v1329, %v1326
      %v1420 = vpack.c.b16 %v1330, %v1327
      %v1421 = vpack.c.b16 %v1334, %v1331
      %v1422 = vpack.c.b16 %v1335, %v1332
      %v1423 = vpack.c.b16 %v1336, %v1333
      %v1424 = vpack.c.b16 %v1340, %v1337
      %v1425 = vpack.c.b16 %v1341, %v1338
      %v1426 = vpack.c.b16 %v1342, %v1339
      %v1427 = vpack.c.b16 %v1346, %v1343
      %v1428 = vpack.c.b16 %v1347, %v1344
      %v1429 = vpack.c.b16 %v1348, %v1345
      %v1430 = vpack.c.b16 %v1352, %v1349
      %v1431 = vpack.c.b16 %v1353, %v1350
      %v1432 = vpack.c.b16 %v1354, %v1351
      %v1433 = vpack.c.b16 %v1358, %v1355
      %v1434 = vpack.c.b16 %v1359, %v1356
      %v1435 = vpack.c.b16 %v1360, %v1357
      %v1436 = vpack.c.b16 %v1364, %v1361
      %v1437 = vpack.c.b16 %v1365, %v1362
      %v1438 = vpack.c.b16 %v1366, %v1363
      %v1488 = vsel %vm584, 1065369472, 0
      %v1491 = vsel %vm584, %v1369, 0
      %v1494 = vsel %vm584, %v1372, 0
      %v1497 = vsel %vm584, %v1375, 0
      %v1500 = vsel %vm584, %v1378, 0
      %v1503 = vsel %vm584, %v1381, 0
      %v1506 = vsel %vm584, %v1384, 0
      %v1509 = vsel %vm584, %v1387, 0
      %v1512 = vsel %vm584, %v1390, 0
      %v1515 = vsel %vm584, %v1393, 0
      %v1518 = vsel %vm584, %v1396, 0
      %v1521 = vsel %vm584, %v1399, 0
      %v1524 = vsel %vm584, %v1402, 0
      %v1527 = vsel %vm584, %v1405, 0
      %v1530 = vsel %vm584, %v1408, 0
      %v1533 = vsel %vm584, %v1411, 0
      %v1536 = vsel %vm584, %v1414, 0
      %v1539 = vsel %vm584, %v1417, 0
      %v1542 = vsel %vm584, %v1420, 0
      %v1545 = vsel %vm584, %v1423, 0
      %v1548 = vsel %vm584, %v1426, 0
      %v1551 = vsel %vm584, %v1429, 0
      %v1554 = vsel %vm584, %v1432, 0
      %v1557 = vsel %vm584, %v1435, 0
      %v1560 = vsel %vm584, %v1438, 0
      %1562 = vmatprep.subr.bf16.mxu0 %v1368
      %1563 = vmatpush1.bf16.xpose.msra.mxu0 %v1367
      %1564 = vmatprep.subr.bf16.mxu0 %v1371
      %1565 = vmatpush1.bf16.xpose.msra.mxu0 %v1370
      %1566 = vmatprep.subr.bf16.mxu0 %v1374
      %1567 = vmatpush1.bf16.xpose.msra.mxu0 %v1373
      %1568 = vmatprep.subr.bf16.mxu0 %v1377
      %1569 = vmatpush1.bf16.xpose.msra.mxu0 %v1376
      %1570 = vmatprep.subr.bf16.mxu0 %v1380
      %1571 = vmatpush1.bf16.xpose.msra.mxu0 %v1379
      %1572 = vmatprep.subr.bf16.mxu0 %v1383
      %1573 = vmatpush1.bf16.xpose.msra.mxu0 %v1382
      %1574 = vmatprep.subr.bf16.mxu0 %v1386
      %1575 = vmatpush1.bf16.xpose.msra.mxu0 %v1385
      %1576 = vmatprep.subr.bf16.mxu0 %v1389
      %1577 = vmatpush1.bf16.xpose.msra.mxu0 %v1388
      %1578 = vmatprep.subr.bf16.mxu0 %v1392
      %1579 = vmatpush1.bf16.xpose.msra.mxu0 %v1391
      %1580 = vmatprep.subr.bf16.mxu0 %v1395
      %1581 = vmatpush1.bf16.xpose.msra.mxu0 %v1394
      %1582 = vmatprep.subr.bf16.mxu0 %v1398
      %1583 = vmatpush1.bf16.xpose.msra.mxu0 %v1397
      %1584 = vmatprep.subr.bf16.mxu0 %v1401
      %1585 = vmatpush1.bf16.xpose.msra.mxu0 %v1400
      %1586 = vmatprep.subr.bf16.mxu0 %v1404
      %1587 = vmatpush1.bf16.xpose.msra.mxu0 %v1403
      %1588 = vmatprep.subr.bf16.mxu0 %v1407
      %1589 = vmatpush1.bf16.xpose.msra.mxu0 %v1406
      %1590 = vmatprep.subr.bf16.mxu0 %v1410
      %1591 = vmatpush1.bf16.xpose.msra.mxu0 %v1409
      %1592 = vmatprep.subr.bf16.mxu0 %v1413
      %1593 = vmatpush1.bf16.xpose.msra.mxu0 %v1412
      %1594 = vmatprep.mubr.bf16.mxu0 1065369472
      %1595 = vmatmul.mubr.bf16.gmra.mrb[0].mxu0 1065369472
      %v1596 = vpop.f32.mrb[0].mxu0
      %v1597 = vadd.f32 0.0, %v1596
      %v1598 = vpop.f32.mrb[0].mxu0
      %v1599 = vadd.f32 0.0, %v1598
      %v1600 = vpop.f32.mrb[0].mxu0
      %v1601 = vpop.f32.mrb[0].mxu0
      %1602 = vdwg.mxu0
      %1603 = vmatprep.subr.bf16.mxu0 0
      %1604 = vmatpush1.bf16.xpose.msra.mxu0 %v1491
      %1605 = vmatprep.subr.bf16.mxu0 0
      %1606 = vmatpush1.bf16.xpose.msra.mxu0 %v1494
      %1607 = vmatprep.subr.bf16.mxu0 0
      %1608 = vmatpush1.bf16.xpose.msra.mxu0 %v1497
      %1609 = vmatprep.subr.bf16.mxu0 0
      %1610 = vmatpush1.bf16.xpose.msra.mxu0 %v1500
      %1611 = vmatprep.subr.bf16.mxu0 0
      %1612 = vmatpush1.bf16.xpose.msra.mxu0 %v1503
      %1613 = vmatprep.subr.bf16.mxu0 0
      %1614 = vmatpush1.bf16.xpose.msra.mxu0 %v1506
      %1615 = vmatprep.subr.bf16.mxu0 0
      %1616 = vmatpush1.bf16.xpose.msra.mxu0 %v1509
      %1617 = vmatprep.subr.bf16.mxu0 0
      %1618 = vmatpush1.bf16.xpose.msra.mxu0 %v1512
      %1619 = vmatprep.subr.bf16.mxu0 0
      %1620 = vmatpush1.bf16.xpose.msra.mxu0 %v1515
      %1621 = vmatprep.subr.bf16.mxu0 0
      %1622 = vmatpush1.bf16.xpose.msra.mxu0 %v1518
      %1623 = vmatprep.subr.bf16.mxu0 0
      %1624 = vmatpush1.bf16.xpose.msra.mxu0 %v1521
      %1625 = vmatprep.subr.bf16.mxu0 0
      %1626 = vmatpush1.bf16.xpose.msra.mxu0 %v1524
      %1627 = vmatprep.subr.bf16.mxu0 0
      %1628 = vmatpush1.bf16.xpose.msra.mxu0 %v1527
      %1629 = vmatprep.subr.bf16.mxu0 0
      %1630 = vmatpush1.bf16.xpose.msra.mxu0 %v1530
      %1631 = vmatprep.subr.bf16.mxu0 0
      %1632 = vmatpush1.bf16.xpose.msra.mxu0 %v1533
      %1633 = vmatprep.subr.bf16.mxu0 0
      %1634 = vmatpush1.bf16.xpose.msra.mxu0 %v1536
      %1635 = vmatprep.mubr.bf16.mxu0 0
      %1636 = vmatmul.mubr.bf16.gmra.mrb[0].mxu0 %v1488
      %v1637 = vpop.f32.mrb[0].mxu0
      %v1638 = vadd.f32 %v1597, %v1637
      %v1639 = vpop.f32.mrb[0].mxu0
      %v1640 = vadd.f32 %v1599, %v1639
      %v1641 = vpop.f32.mrb[0].mxu0
      %v1642 = vpop.f32.mrb[0].mxu0
      %1643 = vdwg.mxu0
      %1644 = vmatprep.subr.bf16.mxu0 %v1416
      %1645 = vmatpush1.bf16.xpose.msra.mxu0 %v1415
      %1646 = vmatprep.subr.bf16.mxu0 %v1419
      %1647 = vmatpush1.bf16.xpose.msra.mxu0 %v1418
      %1648 = vmatprep.subr.bf16.mxu0 %v1422
      %1649 = vmatpush1.bf16.xpose.msra.mxu0 %v1421
      %1650 = vmatprep.subr.bf16.mxu0 %v1425
      %1651 = vmatpush1.bf16.xpose.msra.mxu0 %v1424
      %1652 = vmatprep.subr.bf16.mxu0 %v1428
      %1653 = vmatpush1.bf16.xpose.msra.mxu0 %v1427
      %1654 = vmatprep.subr.bf16.mxu0 %v1431
      %1655 = vmatpush1.bf16.xpose.msra.mxu0 %v1430
      %1656 = vmatprep.subr.bf16.mxu0 %v1434
      %1657 = vmatpush1.bf16.xpose.msra.mxu0 %v1433
      %1658 = vmatprep.subr.bf16.mxu0 %v1437
      %1659 = vmatpush1.bf16.xpose.msra.mxu0 %v1436
      %1660 = vmatprep.subr.bf16.mxu0 0
      %1661 = vmatpush1.bf16.xpose.msra.mxu0 0
      %1662 = vmatprep.subr.bf16.mxu0 0
      %1663 = vmatpush1.bf16.xpose.msra.mxu0 0
      %1664 = vmatprep.subr.bf16.mxu0 0
      %1665 = vmatpush1.bf16.xpose.msra.mxu0 0
      %1666 = vmatprep.subr.bf16.mxu0 0
      %1667 = vmatpush1.bf16.xpose.msra.mxu0 0
      %1668 = vmatprep.subr.bf16.mxu0 0
      %1669 = vmatpush1.bf16.xpose.msra.mxu0 0
      %1670 = vmatprep.subr.bf16.mxu0 0
      %1671 = vmatpush1.bf16.xpose.msra.mxu0 0
      %1672 = vmatprep.subr.bf16.mxu0 0
      %1673 = vmatpush1.bf16.xpose.msra.mxu0 0
      %1674 = vmatprep.subr.bf16.mxu0 0
      %1675 = vmatpush1.bf16.xpose.msra.mxu0 0
      %1676 = vmatprep.mubr.bf16.mxu0 1065369472
      %1677 = vmatmul.mubr.bf16.gmra.mrb[0].mxu0 1065369472
      %v1678 = vpop.f32.mrb[0].mxu0
      %v1679 = vadd.f32 0.0, %v1678
      %v1680 = vpop.f32.mrb[0].mxu0
      %v1681 = vpop.f32.mrb[0].mxu0
      %v1682 = vpop.f32.mrb[0].mxu0
      %1683 = vdwg.mxu0
      %1684 = vmatprep.subr.bf16.mxu0 0
      %1685 = vmatpush1.bf16.xpose.msra.mxu0 %v1539
      %1686 = vmatprep.subr.bf16.mxu0 0
      %1687 = vmatpush1.bf16.xpose.msra.mxu0 %v1542
      %1688 = vmatprep.subr.bf16.mxu0 0
      %1689 = vmatpush1.bf16.xpose.msra.mxu0 %v1545
      %1690 = vmatprep.subr.bf16.mxu0 0
      %1691 = vmatpush1.bf16.xpose.msra.mxu0 %v1548
      %1692 = vmatprep.subr.bf16.mxu0 0
      %1693 = vmatpush1.bf16.xpose.msra.mxu0 %v1551
      %1694 = vmatprep.subr.bf16.mxu0 0
      %1695 = vmatpush1.bf16.xpose.msra.mxu0 %v1554
      %1696 = vmatprep.subr.bf16.mxu0 0
      %1697 = vmatpush1.bf16.xpose.msra.mxu0 %v1557
      %1698 = vmatprep.subr.bf16.mxu0 0
      %1699 = vmatpush1.bf16.xpose.msra.mxu0 %v1560
      %1700 = vmatprep.subr.bf16.mxu0 0
      %1701 = vmatpush1.bf16.xpose.msra.mxu0 0
      %1702 = vmatprep.subr.bf16.mxu0 0
      %1703 = vmatpush1.bf16.xpose.msra.mxu0 0
      %1704 = vmatprep.subr.bf16.mxu0 0
      %1705 = vmatpush1.bf16.xpose.msra.mxu0 0
      %1706 = vmatprep.subr.bf16.mxu0 0
      %1707 = vmatpush1.bf16.xpose.msra.mxu0 0
      %1708 = vmatprep.subr.bf16.mxu0 0
      %1709 = vmatpush1.bf16.xpose.msra.mxu0 0
      %1710 = vmatprep.subr.bf16.mxu0 0
      %1711 = vmatpush1.bf16.xpose.msra.mxu0 0
      %1712 = vmatprep.subr.bf16.mxu0 0
      %1713 = vmatpush1.bf16.xpose.msra.mxu0 0
      %1714 = vmatprep.subr.bf16.mxu0 0
      %1715 = vmatpush1.bf16.xpose.msra.mxu0 0
      %1716 = vmatprep.mubr.bf16.mxu0 0
      %1717 = vmatmul.mubr.bf16.gmra.mrb[0].mxu0 %v1488
      %v1718 = vpop.f32.mrb[0].mxu0
      %v1719 = vadd.f32 %v1679, %v1718
      %v1720 = vpop.f32.mrb[0].mxu0
      %v1721 = vpop.f32.mrb[0].mxu0
      %v1722 = vpop.f32.mrb[0].mxu0
      %1723 = vdwg.mxu0
      %v1727 = vcombine.low %v1638, %v1640
      %v1729 = vunpack.c.l.s4 1966171168
      %v1730 = vunpack.c.0.s8 %v1729
      %v1731 = vlaneseq
      %v1732 = vshrl.u32 %v1731, 7
      %v1733 = vsub.s32 %v1730, %v1732
      %v1734 = vrot.slane %v1727, %v1733
      %v1736 = vunpack.c.l.s4 1966171168
      %v1737 = vunpack.c.0.s8 %v1736
      %v1738 = vlaneseq
      %v1739 = vshrl.u32 %v1738, 7
      %v1740 = vsub.s32 %v1737, %v1739
      %v1741 = vrot.slane %v1719, %v1740
      %v1742 = vcombine.low %v1734, %v1741
      %v1744 = vunpack.c.l.s4 1966171168
      %v1745 = vunpack.c.0.s8 %v1744
      %v1746 = vlaneseq
      %v1747 = vshrl.u32 %v1746, 7
      %v1748 = vsub.s32 %v1745, %v1747
      %v1749 = vrot.slane %v1742, %v1748
      %v1751 = vadd.f32 %v1030, %v1749
      %v1752 = vlaneseq
      %vm1753 = vcmp.ge.s32.totalorder %v1752, 0
      %vm1754 = vcmp.lt.s32.totalorder %v1752, 384
      %vm1755 = vmand %vm1753, %vm1754
      %1756 = vst.msk [vmem:[#allocation4] sm:$0x7] %vm1755, %v1751
    $region21: #{tpu_custom_call.1} parent=1 // pred_fallthru
      _
    // Predicated region
    $region22: #{tpu_custom_call.1} parent=1 // pred_check
      %p1757 = pneg %p14
    $region23: #{tpu_custom_call.1} parent=1 // pred_check_branch
      %1759 = sbr.rel (%p1757) target = $region25
    $region24: #{tpu_custom_call.1} parent=1 // pred_region
      %v1760 = vld [vmem:[#allocation3] sm:$0xff]
      %v1761 = vld [vmem:[#allocation3 + $0x8] sm:$0xff]
      %v1762 = vld [vmem:[#allocation3 + $0x10] sm:$0xff]
      %v1763 = vld [vmem:[#allocation3 + $0x18] sm:$0xff]
      %v1764 = vld [vmem:[#allocation3 + $0x20] sm:$0xff]
      %v1765 = vld [vmem:[#allocation3 + $0x28] sm:$0xff]
      %v1766 = vmax.f32 %v1760, 1e-24
      %v1767 = vmax.f32 %v1761, 1e-24
      %v1768 = vmax.f32 %v1762, 1e-24
      %v1769 = vmax.f32 %v1763, 1e-24
      %v1770 = vmax.f32 %v1764, 1e-24
      %v1771 = vmax.f32 %v1765, 1e-24
      %v1772 = vrsqrt.pop %v1766
      %v1773 = vrsqrt.pop %v1767
      %v1774 = vrsqrt.pop %v1768
      %v1775 = vrsqrt.pop %v1769
      %v1776 = vrsqrt.pop %v1770
      %v1777 = vrsqrt.pop %v1771
      %v1778 = vld [vmem:[#allocation4] sm:$0x7]
      %v1779 = vmax.f32 %v1778, 1e-24
      %v1780 = vrsqrt.pop %v1779
      %v1781 = vld [vmem:[#allocation2] sm:$0xff]
      %v1782 = vld [vmem:[#allocation2 + $0x8] sm:$0xff]
      %v1783 = vld [vmem:[#allocation2 + $0x10] sm:$0xff]
      %v1784 = vld [vmem:[#allocation2 + $0x18] sm:$0xff]
      %v1785 = vld [vmem:[#allocation2 + $0x20] sm:$0xff]
      %v1786 = vld [vmem:[#allocation2 + $0x28] sm:$0xff]
      %v1787 = vld [vmem:[#allocation2 + $0x30] sm:$0xff]
      %v1788 = vld [vmem:[#allocation2 + $0x38] sm:$0xff]
      %v1789 = vld [vmem:[#allocation2 + $0x40] sm:$0xff]
      %v1790 = vld [vmem:[#allocation2 + $0x48] sm:$0xff]
      %v1791 = vld [vmem:[#allocation2 + $0x50] sm:$0xff]
      %v1792 = vld [vmem:[#allocation2 + $0x58] sm:$0xff]
      %v1793 = vld [vmem:[#allocation2 + $0x60] sm:$0xff]
      %v1794 = vld [vmem:[#allocation2 + $0x68] sm:$0xff]
      %v1795 = vld [vmem:[#allocation2 + $0x70] sm:$0xff]
      %v1796 = vld [vmem:[#allocation2 + $0x78] sm:$0xff]
      %v1797 = vld [vmem:[#allocation2 + $0x80] sm:$0xff]
      %v1798 = vld [vmem:[#allocation2 + $0x88] sm:$0xff]
      %1800 = vset.pattern.permute.xlu0 0
      %1801 = vperm.xlu0 %1800, %v1772
      %v1802 = vpop.permute.xlu0 %1801
      %1805 = vset.pattern.permute.xlu0 0
      %1806 = vperm.xlu0 %1805, %v1773
      %v1807 = vpop.permute.xlu0 %1806
      %1810 = vset.pattern.permute.xlu0 0
      %1811 = vperm.xlu0 %1810, %v1774
      %v1812 = vpop.permute.xlu0 %1811
      %1815 = vset.pattern.permute.xlu0 0
      %1816 = vperm.xlu0 %1815, %v1775
      %v1817 = vpop.permute.xlu0 %1816
      %1820 = vset.pattern.permute.xlu0 0
      %1821 = vperm.xlu0 %1820, %v1776
      %v1822 = vpop.permute.xlu0 %1821
      %1825 = vset.pattern.permute.xlu0 0
      %1826 = vperm.xlu0 %1825, %v1777
      %v1827 = vpop.permute.xlu0 %1826
      %v1829 = vmul.f32 %v1781, %v1802
      %v1830 = vmul.f32 %v1782, %v1802
      %v1831 = vmul.f32 %v1783, %v1802
      %v1832 = vmul.f32 %v1784, %v1807
      %v1833 = vmul.f32 %v1785, %v1807
      %v1834 = vmul.f32 %v1786, %v1807
      %v1835 = vmul.f32 %v1787, %v1812
      %v1836 = vmul.f32 %v1788, %v1812
      %v1837 = vmul.f32 %v1789, %v1812
      %v1838 = vmul.f32 %v1790, %v1817
      %v1839 = vmul.f32 %v1791, %v1817
      %v1840 = vmul.f32 %v1792, %v1817
      %v1841 = vmul.f32 %v1793, %v1822
      %v1842 = vmul.f32 %v1794, %v1822
      %v1843 = vmul.f32 %v1795, %v1822
      %v1844 = vmul.f32 %v1796, %v1827
      %v1845 = vmul.f32 %v1797, %v1827
      %v1846 = vmul.f32 %v1798, %v1827
      %v1848 = vlaneseq
      %v1849 = vshrl.u32 %v1848, 7
      %v1850 = vsub.s32 0, %v1849
      %v1851 = vrot.slane %v1780, %v1850
      %v1852 = vlaneseq
      %v1853 = vshrl.u32 %v1852, 7
      %v1854 = vsub.s32 1, %v1853
      %v1855 = vrot.slane %v1780, %v1854
      %v1856 = vlaneseq
      %v1857 = vshrl.u32 %v1856, 7
      %v1858 = vsub.s32 2, %v1857
      %v1859 = vrot.slane %v1780, %v1858
      %v1863 = vmul.f32 %v1829, %v1851
      %v1864 = vmul.f32 %v1830, %v1855
      %v1865 = vmul.f32 %v1831, %v1859
      %v1866 = vmul.f32 %v1832, %v1851
      %v1867 = vmul.f32 %v1833, %v1855
      %v1868 = vmul.f32 %v1834, %v1859
      %v1869 = vmul.f32 %v1835, %v1851
      %v1870 = vmul.f32 %v1836, %v1855
      %v1871 = vmul.f32 %v1837, %v1859
      %v1872 = vmul.f32 %v1838, %v1851
      %v1873 = vmul.f32 %v1839, %v1855
      %v1874 = vmul.f32 %v1840, %v1859
      %v1875 = vmul.f32 %v1841, %v1851
      %v1876 = vmul.f32 %v1842, %v1855
      %v1877 = vmul.f32 %v1843, %v1859
      %v1878 = vmul.f32 %v1844, %v1851
      %v1879 = vmul.f32 %v1845, %v1855
      %v1880 = vmul.f32 %v1846, %v1859
      %1881 = vst [vmem:[#allocation5] sm:$0xff] %v1863
      %1882 = vst [vmem:[#allocation5 + $0x8] sm:$0xff] %v1864
      %1883 = vst [vmem:[#allocation5 + $0x10] sm:$0xff] %v1865
      %1884 = vst [vmem:[#allocation5 + $0x18] sm:$0xff] %v1866
      %1885 = vst [vmem:[#allocation5 + $0x20] sm:$0xff] %v1867
      %1886 = vst [vmem:[#allocation5 + $0x28] sm:$0xff] %v1868
      %1887 = vst [vmem:[#allocation5 + $0x30] sm:$0xff] %v1869
      %1888 = vst [vmem:[#allocation5 + $0x38] sm:$0xff] %v1870
      %1889 = vst [vmem:[#allocation5 + $0x40] sm:$0xff] %v1871
      %1890 = vst [vmem:[#allocation5 + $0x48] sm:$0xff] %v1872
      %1891 = vst [vmem:[#allocation5 + $0x50] sm:$0xff] %v1873
      %1892 = vst [vmem:[#allocation5 + $0x58] sm:$0xff] %v1874
      %1893 = vst [vmem:[#allocation5 + $0x60] sm:$0xff] %v1875
      %1894 = vst [vmem:[#allocation5 + $0x68] sm:$0xff] %v1876
      %1895 = vst [vmem:[#allocation5 + $0x70] sm:$0xff] %v1877
      %1896 = vst [vmem:[#allocation5 + $0x78] sm:$0xff] %v1878
      %1897 = vst [vmem:[#allocation5 + $0x80] sm:$0xff] %v1879
      %1898 = vst [vmem:[#allocation5 + $0x88] sm:$0xff] %v1880
    $region25: #{tpu_custom_call.1} parent=1 // pred_fallthru
      _
    // Predicated region
    $region26: #{tpu_custom_call.1} parent=1 // pred_check
      _
    $region27: #{tpu_custom_call.1} parent=1 // pred_check_branch
      %1900 = sbr.rel (0) target = $region29
    $region28: #{tpu_custom_call.1} parent=1 // pred_region
      %s1902 = ssub.s32 2304, 2304
      %1903 = vsyncadd [#allocation6], %s1902
      %s1904 = sshll.u32 [#allocation5], 4
      %s1905 = int_to_ptr.vmem [resolvable:$true] %s1904
      %1910 = dma.vmem_to_hbm [thread:$0]  %s1905, 2304, %s2, [#allocation6], 384, 384, 24
    $region29: #{tpu_custom_call.1} parent=1 // pred_fallthru
      _
    // Predicated region
    $region30: #{tpu_custom_call.1} parent=1 // pred_check
      _
    $region31: #{tpu_custom_call.1} parent=1 // pred_check_branch
      %1912 = sbr.rel (0) target = $region33
    $region32: #{tpu_custom_call.1} parent=1 // pred_region
      %1913 = dma.done [#allocation6], 2304
    $region33: #{tpu_custom_call.1} parent=1 // pred_fallthru
      _
    %1914 = vsyncpa [#allocation6], 1

</llo_original>
